<compile_context>
chip_gen: v7x
topology: tpu7x:2x2x1
jax: 0.10.0
libtpu: 0.0.40
codegen_flags: <defaults>
</compile_context>

<pallas_src>
import jax
import jax.numpy as jnp
from jax.experimental import pallas as pl
from jax.experimental.pallas import tpu as pltpu

HIDDEN = 64
EV_DIM = 16
TP_DIM = 8
NUM_DIM = 6
IN_DIM = EV_DIM + TP_DIM + NUM_DIM  # 30
IN_PAD = 32                         # padded contraction depth
OUT_DIM = 3


# ----------------------------------------------------------------------------
# Pallas kernel
# ----------------------------------------------------------------------------
def hockey_kernel(
    x_ref,        # (T, B, IN_PAD) f32   time-major inputs (zero-padded depth)
    len_ref,      # (1, B)         i32
    wih0_ref,     # (IN_PAD, 4H)         layer-0 input weights (gate-reordered)
    wbig_ref,     # (2H, 8H)             fused [[wih1;whh1] | [whh0;0]]
    bias4h_ref,   # (2, 4H)              row0 = bih0+bhh0, row1 = bih1+bhh1
    vecs_ref,     # (5, H)               rows: ba, av, gamma, beta, bfc(padded)
    whead_ref,    # (H, H+OUT)           [attn_lin.weight^T | fc.weight^T]
    out_ref,      # (B, OUT)
):
    T, B, _ = x_ref.shape
    H = HIDDEN
    H4 = 4 * H

    # ---- unpack packed params (one-time, outside the recurrence) ----
    b0 = bias4h_ref[0:1, :]
    b1 = jnp.broadcast_to(bias4h_ref[1:2, :], (B, H4))
    ba = vecs_ref[0:1, :]
    av = vecs_ref[1:2, :]
    gamma = vecs_ref[2:3, :]
    beta = vecs_ref[3:4, :]
    bfc = vecs_ref[4:5, :OUT_DIM]
    wa = whead_ref[:, :H]
    wfc = whead_ref[:, H:H + OUT_DIM]
    w_big = wbig_ref[...]

    # ---- layer-0 input projection, hoisted: one large MXU matmul, in vregs ----
    x2 = x_ref[...].reshape(T * B, IN_PAD)
    pre0 = (jnp.dot(x2, wih0_ref[...], preferred_element_type=jnp.float32)
            + b0).reshape(T, B, H4)

    def gates(g, c):
        # gate columns are [i, f, o, g]: one sigmoid over 3H + one tanh over H
        s = jax.nn.sigmoid(g[:, :3 * H])
        i_g = s[:, :H]
        f_g = s[:, H:2 * H]
        o_g = s[:, 2 * H:]
        c_g = jnp.tanh(g[:, 3 * H:])
        c_new = f_g * c + i_g * c_g
        return o_g * jnp.tanh(c_new), c_new

    # ---- recurrence: state lives in vregs, one fused matmul per step ----
    z = jnp.zeros((B, H), jnp.float32)
    g0_rec = jnp.zeros((B, H4), jnp.float32)   # h0(-1) = 0
    c0, h1, c1 = z, z, z
    seq_steps = []
    for t in range(T):                          # fully unrolled (T static)
        h0, c0 = gates(pre0[t] + g0_rec, c0)
        xh = jnp.concatenate([h0, h1], axis=1)                       # (B, 2H)
        big = jnp.dot(xh, w_big, preferred_element_type=jnp.float32)  # (B, 8H)
        g0_rec = big[:, H4:]                    # layer-0 recurrent part, t+1
        h1, c1 = gates(big[:, :H4] + b1, c1)    # layer-1 gates for step t
        seq_steps.append(h1)

    seq = jnp.stack(seq_steps, axis=0)          # (T, B, H), still in vregs

    # ---- attention: projection + score hoisted out of the time loop ----
    u = jnp.tanh(jnp.dot(seq.reshape(T * B, H), wa,
                         preferred_element_type=jnp.float32) + ba)   # (T*B, H)
    scores = jnp.sum((u * av).reshape(T, B, H), axis=2)              # (T, B)

    # masked softmax over time, lane-dense 2-D
    t_idx = jax.lax.broadcasted_iota(jnp.int32, (T, B), 0)
    scores = jnp.where(t_idx < len_ref[...], scores, -1e9)
    m = jnp.max(scores, axis=0, keepdims=True)
    e = jnp.exp(scores - m)
    w = e / jnp.sum(e, axis=0, keepdims=True)                        # (T, B)

    context = jnp.sum(w[:, :, None] * seq, axis=0)                   # (B, H)

    # LayerNorm over the hidden dim
    mu = jnp.mean(context, axis=1, keepdims=True)
    var = jnp.mean(jnp.square(context - mu), axis=1, keepdims=True)
    zc = (context - mu) * jax.lax.rsqrt(var + 1e-5)
    zc = zc * gamma + beta

    # final linear head (dropout is identity in eval mode)
    out_ref[...] = (jnp.dot(zc, wfc, preferred_element_type=jnp.float32) + bfc)


# ----------------------------------------------------------------------------
# Wrapper (glue: embedding lookup, concat, transposes, padding, weight fusion)
# ----------------------------------------------------------------------------
@jax.jit
def hockey_forward(params, ev, tp, num, lengths):
    H = HIDDEN
    # embedding gather + concat (glue, plain JAX)
    x = jnp.concatenate(
        [params["event_table"][ev], params["type_table"][tp], num], axis=-1
    ).astype(jnp.float32)                                  # (B, T, IN_DIM)
    B, T, _ = x.shape

    # time-major, pad batch to sublane multiple (8) and depth 30 -> 32
    Bp = ((B + 7) // 8) * 8
    x_tm = jnp.transpose(x, (1, 0, 2))                     # (T, B, IN_DIM)
    x_tm = jnp.pad(x_tm, ((0, 0), (0, Bp - B), (0, IN_PAD - IN_DIM)))
    lens = jnp.pad(lengths.astype(jnp.int32), (0, Bp - B)).reshape(1, Bp)

    # gate-column reorder: PyTorch [i, f, g, o] -> [i, f, o, g]
    def reorder(wt):
        return jnp.concatenate(
            [wt[..., :H], wt[..., H:2 * H], wt[..., 3 * H:], wt[..., 2 * H:3 * H]],
            axis=-1)

    wih0 = jnp.pad(reorder(params["wih0"].T), ((0, IN_PAD - IN_DIM), (0, 0)))
    whh0 = reorder(params["whh0"].T)                       # (H, 4H)
    wih1 = reorder(params["wih1"].T)                       # (H, 4H)
    whh1 = reorder(params["whh1"].T)                       # (H, 4H)
    b0 = reorder((params["bih0"] + params["bhh0"]).reshape(1, 4 * H))
    b1 = reorder((params["bih1"] + params["bhh1"]).reshape(1, 4 * H))

    # fused per-step weight: [h0(t)|h1(t-1)] @ Wbig -> [g1(t) | g0_rec(t+1)]
    w_big = jnp.concatenate([
        jnp.concatenate([wih1, whh0], axis=1),                   # rows: h0(t)
        jnp.concatenate([whh1, jnp.zeros_like(whh0)], axis=1),   # rows: h1(t-1)
    ], axis=0)                                                   # (2H, 8H)

    bias4h = jnp.concatenate([b0, b1], axis=0)                   # (2, 4H)
    vecs = jnp.stack([
        params["ba"], params["av"], params["gamma"], params["beta"],
        jnp.pad(params["bfc"], (0, H - OUT_DIM)),
    ], axis=0)                                                   # (5, H)
    w_head = jnp.concatenate([params["wa"].T, params["wfc"].T], axis=1)

    args = (x_tm, lens, wih0, w_big, bias4h, vecs, w_head)
    vmem = pl.BlockSpec(memory_space=pltpu.MemorySpace.VMEM)
    out = pl.pallas_call(
        hockey_kernel,
        out_shape=jax.ShapeDtypeStruct((Bp, OUT_DIM), jnp.float32),
        in_specs=[vmem] * len(args),
        out_specs=vmem,
    )(*args)
    return out[:B]


# ----------------------------------------------------------------------------
# Deterministic parameter init (shapes from HockeyModel.__init__)
# ----------------------------------------------------------------------------
def init_params(key, event_vocab, type_vocab):
    H = HIDDEN
    ks = jax.random.split(key, 16)
    s = 1.0 / jnp.sqrt(jnp.float32(H))

    def u(k, shape, scale):
        return jax.random.uniform(k, shape, jnp.float32, -scale, scale)

    params = dict(
        # padding_idx=0 -> row 0 zeroed
        event_table=jax.random.normal(ks[0], (event_vocab, EV_DIM), jnp.float32).at[0].set(0.0),
        type_table=jax.random.normal(ks[1], (type_vocab, TP_DIM), jnp.float32).at[0].set(0.0),
        wih0=u(ks[2], (4 * H, IN_DIM), s), whh0=u(ks[3], (4 * H, H), s),
        bih0=u(ks[4], (4 * H,), s), bhh0=u(ks[5], (4 * H,), s),
        wih1=u(ks[6], (4 * H, H), s), whh1=u(ks[7], (4 * H, H), s),
        bih1=u(ks[8], (4 * H,), s), bhh1=u(ks[9], (4 * H,), s),
        wa=u(ks[10], (H, H), s), ba=u(ks[11], (H,), s),
        av=u(ks[12], (H,), jnp.sqrt(6.0 / (H + 1.0))),   # xavier_uniform on (1,H)
        gamma=jnp.ones((H,), jnp.float32), beta=jnp.zeros((H,), jnp.float32),
        wfc=u(ks[13], (OUT_DIM, H), s), bfc=u(ks[14], (OUT_DIM,), s),
    )
    return params


# ----------------------------------------------------------------------------
# Pure-JAX reference (mirrors the PyTorch forward) for validation
# ----------------------------------------------------------------------------
def reference_forward(params, ev, tp, num, lengths):
    H = HIDDEN
    x = jnp.concatenate(
        [params["event_table"][ev], params["type_table"][tp], num], axis=-1)
    B, T, _ = x.shape

    def cell(x_t, h, c, wih, whh, b):
        g = x_t @ wih.T + h @ whh.T + b
        i = jax.nn.sigmoid(g[:, :H])
        f = jax.nn.sigmoid(g[:, H:2 * H])
        gg = jnp.tanh(g[:, 2 * H:3 * H])
        o = jax.nn.sigmoid(g[:, 3 * H:])
        c = f * c + i * gg
        return o * jnp.tanh(c), c

    def scan_fn(carry, x_t):
        h0, c0, h1, c1 = carry
        h0, c0 = cell(x_t, h0, c0, params["wih0"], params["whh0"],
                      params["bih0"] + params["bhh0"])
        h1, c1 = cell(h0, h1, c1, params["wih1"], params["whh1"],
                      params["bih1"] + params["bhh1"])
        return (h0, c0, h1, c1), h1

    init = tuple(jnp.zeros((B, H), jnp.float32) for _ in range(4))
    _, outs = jax.lax.scan(scan_fn, init, jnp.swapaxes(x, 0, 1))
    out = jnp.swapaxes(outs, 0, 1)                     # (B, T, H)

    u = jnp.tanh(out @ params["wa"].T + params["ba"])
    scores = u @ params["av"]                          # (B, T)
    mask = jnp.arange(T)[None, :] < lengths[:, None]
    scores = jnp.where(mask, scores, -1e9)
    w = jax.nn.softmax(scores, axis=1)[..., None]
    context = jnp.sum(w * out, axis=1)
    mu = context.mean(-1, keepdims=True)
    var = ((context - mu) ** 2).mean(-1, keepdims=True)
    z = (context - mu) / jnp.sqrt(var + 1e-5)
    z = z * params["gamma"] + params["beta"]
    return z @ params["wfc"].T + params["bfc"]


# ----------------------------------------------------------------------------
if __name__ == "__main__":
    key = jax.random.PRNGKey(0)
    B, T = 2, 8
    event_vocab, type_vocab = 10, 5

    kp, kd = jax.random.split(key)
    params = init_params(kp, event_vocab, type_vocab)

    k1, k2, k3 = jax.random.split(kd, 3)
    lengths = jnp.array([T, 5], dtype=jnp.int32)
    ev = jax.random.randint(k1, (B, T), 1, event_vocab, dtype=jnp.int32)
    tp = jax.random.randint(k2, (B, T), 1, type_vocab, dtype=jnp.int32)
    num = jax.random.normal(k3, (B, T, NUM_DIM), dtype=jnp.float32)

    # zero out padded positions (padding_idx=0 / padded numerics)
    valid = jnp.arange(T)[None, :] < lengths[:, None]
    ev = jnp.where(valid, ev, 0)
    tp = jnp.where(valid, tp, 0)
    num = jnp.where(valid[..., None], num, 0.0)

    out = hockey_forward(params, ev, tp, num, lengths)
    out = jax.block_until_ready(out)

    ref = reference_forward(params, ev, tp, num, lengths)
    assert out.shape == (B, OUT_DIM), out.shape
    assert jnp.allclose(out, ref, atol=5e-3, rtol=5e-3), (out, ref)

    print("KERNEL_OK")
</pallas_src>

<mosaic_0001>
module attributes {stable_mosaic.version = 11 : i64} {
  func.func @hockey_kernel(%arg0: memref<8x8x32xf32, #tpu.memory_space<vmem>>, %arg1: memref<1x8xi32, #tpu.memory_space<vmem>>, %arg2: memref<32x256xf32, #tpu.memory_space<vmem>>, %arg3: memref<128x512xf32, #tpu.memory_space<vmem>>, %arg4: memref<2x256xf32, #tpu.memory_space<vmem>>, %arg5: memref<5x64xf32, #tpu.memory_space<vmem>>, %arg6: memref<64x67xf32, #tpu.memory_space<vmem>>, %arg7: memref<8x3xf32, #tpu.memory_space<vmem>>) attributes {dimension_semantics = [], scalar_prefetch = 0 : i64, scratch_operands = 0 : i64, tpu.core_type = #tpu.core_type<tc>} {
    %c0 = arith.constant 0 : index
    %c0_0 = arith.constant 0 : index
    %0 = vector.load %arg4[%c0, %c0_0] : memref<2x256xf32, #tpu.memory_space<vmem>>, vector<1x256xf32>
    %c1 = arith.constant 1 : index
    %c0_1 = arith.constant 0 : index
    %1 = vector.load %arg4[%c1, %c0_1] : memref<2x256xf32, #tpu.memory_space<vmem>>, vector<1x256xf32>
    %2 = vector.shape_cast %1 : vector<1x256xf32> to vector<1x256xf32>
    %3 = vector.broadcast %2 : vector<1x256xf32> to vector<8x256xf32>
    %c0_2 = arith.constant 0 : index
    %c0_3 = arith.constant 0 : index
    %4 = vector.load %arg5[%c0_2, %c0_3] : memref<5x64xf32, #tpu.memory_space<vmem>>, vector<1x64xf32>
    %c1_4 = arith.constant 1 : index
    %c0_5 = arith.constant 0 : index
    %5 = vector.load %arg5[%c1_4, %c0_5] : memref<5x64xf32, #tpu.memory_space<vmem>>, vector<1x64xf32>
    %c2 = arith.constant 2 : index
    %c0_6 = arith.constant 0 : index
    %6 = vector.load %arg5[%c2, %c0_6] : memref<5x64xf32, #tpu.memory_space<vmem>>, vector<1x64xf32>
    %c3 = arith.constant 3 : index
    %c0_7 = arith.constant 0 : index
    %7 = vector.load %arg5[%c3, %c0_7] : memref<5x64xf32, #tpu.memory_space<vmem>>, vector<1x64xf32>
    %c4 = arith.constant 4 : index
    %c0_8 = arith.constant 0 : index
    %8 = vector.load %arg5[%c4, %c0_8] : memref<5x64xf32, #tpu.memory_space<vmem>>, vector<1x3xf32>
    %c0_9 = arith.constant 0 : index
    %c0_10 = arith.constant 0 : index
    %9 = vector.load %arg6[%c0_9, %c0_10] : memref<64x67xf32, #tpu.memory_space<vmem>>, vector<64x64xf32>
    %c0_11 = arith.constant 0 : index
    %c64 = arith.constant 64 : index
    %10 = vector.load %arg6[%c0_11, %c64] : memref<64x67xf32, #tpu.memory_space<vmem>>, vector<64x3xf32>
    %c0_12 = arith.constant 0 : index
    %c0_13 = arith.constant 0 : index
    %11 = vector.load %arg3[%c0_12, %c0_13] : memref<128x512xf32, #tpu.memory_space<vmem>>, vector<128x512xf32>
    %c0_14 = arith.constant 0 : index
    %c0_15 = arith.constant 0 : index
    %c0_16 = arith.constant 0 : index
    %12 = vector.load %arg0[%c0_14, %c0_15, %c0_16] : memref<8x8x32xf32, #tpu.memory_space<vmem>>, vector<8x8x32xf32>
    %13 = vector.shape_cast %12 : vector<8x8x32xf32> to vector<64x32xf32>
    %c0_17 = arith.constant 0 : index
    %c0_18 = arith.constant 0 : index
    %14 = vector.load %arg2[%c0_17, %c0_18] : memref<32x256xf32, #tpu.memory_space<vmem>>, vector<32x256xf32>
    %cst = arith.constant dense<0.000000e+00> : vector<64x256xf32>
    %15 = tpu.matmul %13, %14, %cst {dimension_numbers = #tpu.dot_dimension_numbers<[1], [0], [0], [1], [0, 0, 1, 1], [], []>} : vector<64x32xf32>, vector<32x256xf32>, vector<64x256xf32> -> vector<64x256xf32>
    %16 = vector.broadcast %0 : vector<1x256xf32> to vector<64x256xf32>
    %17 = arith.addf %15, %16 : vector<64x256xf32>
    %18 = vector.shape_cast %17 : vector<64x256xf32> to vector<8x8x256xf32>
    %cst_19 = arith.constant 0.000000e+00 : f32
    %19 = vector.broadcast %cst_19 : f32 to vector<8x64xf32>
    %cst_20 = arith.constant 0.000000e+00 : f32
    %20 = vector.broadcast %cst_20 : f32 to vector<8x256xf32>
    %21 = vector.extract_strided_slice %18 {offsets = [0, 0, 0], sizes = [1, 8, 256], strides = [1, 1, 1]} : vector<8x8x256xf32> to vector<1x8x256xf32>
    %22 = vector.shape_cast %21 : vector<1x8x256xf32> to vector<8x256xf32>
    %23 = arith.addf %22, %20 : vector<8x256xf32>
    %24 = vector.extract_strided_slice %23 {offsets = [0, 0], sizes = [8, 192], strides = [1, 1]} : vector<8x256xf32> to vector<8x192xf32>
    %25 = arith.negf %24 : vector<8x192xf32>
    %26 = math.exp %25 : vector<8x192xf32>
    %cst_21 = arith.constant 1.000000e+00 : f32
    %27 = vector.broadcast %cst_21 : f32 to vector<8x192xf32>
    %28 = arith.addf %27, %26 : vector<8x192xf32>
    %29 = arith.divf %27, %28 : vector<8x192xf32>
    %30 = vector.extract_strided_slice %29 {offsets = [0, 0], sizes = [8, 64], strides = [1, 1]} : vector<8x192xf32> to vector<8x64xf32>
    %31 = vector.extract_strided_slice %29 {offsets = [0, 64], sizes = [8, 64], strides = [1, 1]} : vector<8x192xf32> to vector<8x64xf32>
    %32 = vector.extract_strided_slice %29 {offsets = [0, 128], sizes = [8, 64], strides = [1, 1]} : vector<8x192xf32> to vector<8x64xf32>
    %33 = vector.extract_strided_slice %23 {offsets = [0, 192], sizes = [8, 64], strides = [1, 1]} : vector<8x256xf32> to vector<8x64xf32>
    %34 = math.tanh %33 : vector<8x64xf32>
    %35 = arith.mulf %31, %19 : vector<8x64xf32>
    %36 = arith.mulf %30, %34 : vector<8x64xf32>
    %37 = arith.addf %35, %36 : vector<8x64xf32>
    %38 = math.tanh %37 : vector<8x64xf32>
    %39 = arith.mulf %32, %38 : vector<8x64xf32>
    %40 = tpu.concatenate %39, %19 in 1 : vector<8x64xf32>, vector<8x64xf32> -> vector<8x128xf32>
    %cst_22 = arith.constant dense<0.000000e+00> : vector<8x512xf32>
    %41 = tpu.matmul %40, %11, %cst_22 {dimension_numbers = #tpu.dot_dimension_numbers<[1], [0], [0], [1], [0, 0, 1, 1], [], []>} : vector<8x128xf32>, vector<128x512xf32>, vector<8x512xf32> -> vector<8x512xf32>
    %42 = vector.extract_strided_slice %41 {offsets = [0, 256], sizes = [8, 256], strides = [1, 1]} : vector<8x512xf32> to vector<8x256xf32>
    %43 = vector.extract_strided_slice %41 {offsets = [0, 0], sizes = [8, 256], strides = [1, 1]} : vector<8x512xf32> to vector<8x256xf32>
    %44 = arith.addf %43, %3 : vector<8x256xf32>
    %45 = vector.extract_strided_slice %44 {offsets = [0, 0], sizes = [8, 192], strides = [1, 1]} : vector<8x256xf32> to vector<8x192xf32>
    %46 = arith.negf %45 : vector<8x192xf32>
    %47 = math.exp %46 : vector<8x192xf32>
    %cst_23 = arith.constant 1.000000e+00 : f32
    %48 = vector.broadcast %cst_23 : f32 to vector<8x192xf32>
    %49 = arith.addf %48, %47 : vector<8x192xf32>
    %50 = arith.divf %48, %49 : vector<8x192xf32>
    %51 = vector.extract_strided_slice %50 {offsets = [0, 0], sizes = [8, 64], strides = [1, 1]} : vector<8x192xf32> to vector<8x64xf32>
    %52 = vector.extract_strided_slice %50 {offsets = [0, 64], sizes = [8, 64], strides = [1, 1]} : vector<8x192xf32> to vector<8x64xf32>
    %53 = vector.extract_strided_slice %50 {offsets = [0, 128], sizes = [8, 64], strides = [1, 1]} : vector<8x192xf32> to vector<8x64xf32>
    %54 = vector.extract_strided_slice %44 {offsets = [0, 192], sizes = [8, 64], strides = [1, 1]} : vector<8x256xf32> to vector<8x64xf32>
    %55 = math.tanh %54 : vector<8x64xf32>
    %56 = arith.mulf %52, %19 : vector<8x64xf32>
    %57 = arith.mulf %51, %55 : vector<8x64xf32>
    %58 = arith.addf %56, %57 : vector<8x64xf32>
    %59 = math.tanh %58 : vector<8x64xf32>
    %60 = arith.mulf %53, %59 : vector<8x64xf32>
    %61 = vector.extract_strided_slice %18 {offsets = [1, 0, 0], sizes = [1, 8, 256], strides = [1, 1, 1]} : vector<8x8x256xf32> to vector<1x8x256xf32>
    %62 = vector.shape_cast %61 : vector<1x8x256xf32> to vector<8x256xf32>
    %63 = arith.addf %62, %42 : vector<8x256xf32>
    %64 = vector.extract_strided_slice %63 {offsets = [0, 0], sizes = [8, 192], strides = [1, 1]} : vector<8x256xf32> to vector<8x192xf32>
    %65 = arith.negf %64 : vector<8x192xf32>
    %66 = math.exp %65 : vector<8x192xf32>
    %cst_24 = arith.constant 1.000000e+00 : f32
    %67 = vector.broadcast %cst_24 : f32 to vector<8x192xf32>
    %68 = arith.addf %67, %66 : vector<8x192xf32>
    %69 = arith.divf %67, %68 : vector<8x192xf32>
    %70 = vector.extract_strided_slice %69 {offsets = [0, 0], sizes = [8, 64], strides = [1, 1]} : vector<8x192xf32> to vector<8x64xf32>
    %71 = vector.extract_strided_slice %69 {offsets = [0, 64], sizes = [8, 64], strides = [1, 1]} : vector<8x192xf32> to vector<8x64xf32>
    %72 = vector.extract_strided_slice %69 {offsets = [0, 128], sizes = [8, 64], strides = [1, 1]} : vector<8x192xf32> to vector<8x64xf32>
    %73 = vector.extract_strided_slice %63 {offsets = [0, 192], sizes = [8, 64], strides = [1, 1]} : vector<8x256xf32> to vector<8x64xf32>
    %74 = math.tanh %73 : vector<8x64xf32>
    %75 = arith.mulf %71, %37 : vector<8x64xf32>
    %76 = arith.mulf %70, %74 : vector<8x64xf32>
    %77 = arith.addf %75, %76 : vector<8x64xf32>
    %78 = math.tanh %77 : vector<8x64xf32>
    %79 = arith.mulf %72, %78 : vector<8x64xf32>
    %80 = tpu.concatenate %79, %60 in 1 : vector<8x64xf32>, vector<8x64xf32> -> vector<8x128xf32>
    %cst_25 = arith.constant dense<0.000000e+00> : vector<8x512xf32>
    %81 = tpu.matmul %80, %11, %cst_25 {dimension_numbers = #tpu.dot_dimension_numbers<[1], [0], [0], [1], [0, 0, 1, 1], [], []>} : vector<8x128xf32>, vector<128x512xf32>, vector<8x512xf32> -> vector<8x512xf32>
    %82 = vector.extract_strided_slice %81 {offsets = [0, 256], sizes = [8, 256], strides = [1, 1]} : vector<8x512xf32> to vector<8x256xf32>
    %83 = vector.extract_strided_slice %81 {offsets = [0, 0], sizes = [8, 256], strides = [1, 1]} : vector<8x512xf32> to vector<8x256xf32>
    %84 = arith.addf %83, %3 : vector<8x256xf32>
    %85 = vector.extract_strided_slice %84 {offsets = [0, 0], sizes = [8, 192], strides = [1, 1]} : vector<8x256xf32> to vector<8x192xf32>
    %86 = arith.negf %85 : vector<8x192xf32>
    %87 = math.exp %86 : vector<8x192xf32>
    %cst_26 = arith.constant 1.000000e+00 : f32
    %88 = vector.broadcast %cst_26 : f32 to vector<8x192xf32>
    %89 = arith.addf %88, %87 : vector<8x192xf32>
    %90 = arith.divf %88, %89 : vector<8x192xf32>
    %91 = vector.extract_strided_slice %90 {offsets = [0, 0], sizes = [8, 64], strides = [1, 1]} : vector<8x192xf32> to vector<8x64xf32>
    %92 = vector.extract_strided_slice %90 {offsets = [0, 64], sizes = [8, 64], strides = [1, 1]} : vector<8x192xf32> to vector<8x64xf32>
    %93 = vector.extract_strided_slice %90 {offsets = [0, 128], sizes = [8, 64], strides = [1, 1]} : vector<8x192xf32> to vector<8x64xf32>
    %94 = vector.extract_strided_slice %84 {offsets = [0, 192], sizes = [8, 64], strides = [1, 1]} : vector<8x256xf32> to vector<8x64xf32>
    %95 = math.tanh %94 : vector<8x64xf32>
    %96 = arith.mulf %92, %58 : vector<8x64xf32>
    %97 = arith.mulf %91, %95 : vector<8x64xf32>
    %98 = arith.addf %96, %97 : vector<8x64xf32>
    %99 = math.tanh %98 : vector<8x64xf32>
    %100 = arith.mulf %93, %99 : vector<8x64xf32>
    %101 = vector.extract_strided_slice %18 {offsets = [2, 0, 0], sizes = [1, 8, 256], strides = [1, 1, 1]} : vector<8x8x256xf32> to vector<1x8x256xf32>
    %102 = vector.shape_cast %101 : vector<1x8x256xf32> to vector<8x256xf32>
    %103 = arith.addf %102, %82 : vector<8x256xf32>
    %104 = vector.extract_strided_slice %103 {offsets = [0, 0], sizes = [8, 192], strides = [1, 1]} : vector<8x256xf32> to vector<8x192xf32>
    %105 = arith.negf %104 : vector<8x192xf32>
    %106 = math.exp %105 : vector<8x192xf32>
    %cst_27 = arith.constant 1.000000e+00 : f32
    %107 = vector.broadcast %cst_27 : f32 to vector<8x192xf32>
    %108 = arith.addf %107, %106 : vector<8x192xf32>
    %109 = arith.divf %107, %108 : vector<8x192xf32>
    %110 = vector.extract_strided_slice %109 {offsets = [0, 0], sizes = [8, 64], strides = [1, 1]} : vector<8x192xf32> to vector<8x64xf32>
    %111 = vector.extract_strided_slice %109 {offsets = [0, 64], sizes = [8, 64], strides = [1, 1]} : vector<8x192xf32> to vector<8x64xf32>
    %112 = vector.extract_strided_slice %109 {offsets = [0, 128], sizes = [8, 64], strides = [1, 1]} : vector<8x192xf32> to vector<8x64xf32>
    %113 = vector.extract_strided_slice %103 {offsets = [0, 192], sizes = [8, 64], strides = [1, 1]} : vector<8x256xf32> to vector<8x64xf32>
    %114 = math.tanh %113 : vector<8x64xf32>
    %115 = arith.mulf %111, %77 : vector<8x64xf32>
    %116 = arith.mulf %110, %114 : vector<8x64xf32>
    %117 = arith.addf %115, %116 : vector<8x64xf32>
    %118 = math.tanh %117 : vector<8x64xf32>
    %119 = arith.mulf %112, %118 : vector<8x64xf32>
    %120 = tpu.concatenate %119, %100 in 1 : vector<8x64xf32>, vector<8x64xf32> -> vector<8x128xf32>
    %cst_28 = arith.constant dense<0.000000e+00> : vector<8x512xf32>
    %121 = tpu.matmul %120, %11, %cst_28 {dimension_numbers = #tpu.dot_dimension_numbers<[1], [0], [0], [1], [0, 0, 1, 1], [], []>} : vector<8x128xf32>, vector<128x512xf32>, vector<8x512xf32> -> vector<8x512xf32>
    %122 = vector.extract_strided_slice %121 {offsets = [0, 256], sizes = [8, 256], strides = [1, 1]} : vector<8x512xf32> to vector<8x256xf32>
    %123 = vector.extract_strided_slice %121 {offsets = [0, 0], sizes = [8, 256], strides = [1, 1]} : vector<8x512xf32> to vector<8x256xf32>
    %124 = arith.addf %123, %3 : vector<8x256xf32>
    %125 = vector.extract_strided_slice %124 {offsets = [0, 0], sizes = [8, 192], strides = [1, 1]} : vector<8x256xf32> to vector<8x192xf32>
    %126 = arith.negf %125 : vector<8x192xf32>
    %127 = math.exp %126 : vector<8x192xf32>
    %cst_29 = arith.constant 1.000000e+00 : f32
    %128 = vector.broadcast %cst_29 : f32 to vector<8x192xf32>
    %129 = arith.addf %128, %127 : vector<8x192xf32>
    %130 = arith.divf %128, %129 : vector<8x192xf32>
    %131 = vector.extract_strided_slice %130 {offsets = [0, 0], sizes = [8, 64], strides = [1, 1]} : vector<8x192xf32> to vector<8x64xf32>
    %132 = vector.extract_strided_slice %130 {offsets = [0, 64], sizes = [8, 64], strides = [1, 1]} : vector<8x192xf32> to vector<8x64xf32>
    %133 = vector.extract_strided_slice %130 {offsets = [0, 128], sizes = [8, 64], strides = [1, 1]} : vector<8x192xf32> to vector<8x64xf32>
    %134 = vector.extract_strided_slice %124 {offsets = [0, 192], sizes = [8, 64], strides = [1, 1]} : vector<8x256xf32> to vector<8x64xf32>
    %135 = math.tanh %134 : vector<8x64xf32>
    %136 = arith.mulf %132, %98 : vector<8x64xf32>
    %137 = arith.mulf %131, %135 : vector<8x64xf32>
    %138 = arith.addf %136, %137 : vector<8x64xf32>
    %139 = math.tanh %138 : vector<8x64xf32>
    %140 = arith.mulf %133, %139 : vector<8x64xf32>
    %141 = vector.extract_strided_slice %18 {offsets = [3, 0, 0], sizes = [1, 8, 256], strides = [1, 1, 1]} : vector<8x8x256xf32> to vector<1x8x256xf32>
    %142 = vector.shape_cast %141 : vector<1x8x256xf32> to vector<8x256xf32>
    %143 = arith.addf %142, %122 : vector<8x256xf32>
    %144 = vector.extract_strided_slice %143 {offsets = [0, 0], sizes = [8, 192], strides = [1, 1]} : vector<8x256xf32> to vector<8x192xf32>
    %145 = arith.negf %144 : vector<8x192xf32>
    %146 = math.exp %145 : vector<8x192xf32>
    %cst_30 = arith.constant 1.000000e+00 : f32
    %147 = vector.broadcast %cst_30 : f32 to vector<8x192xf32>
    %148 = arith.addf %147, %146 : vector<8x192xf32>
    %149 = arith.divf %147, %148 : vector<8x192xf32>
    %150 = vector.extract_strided_slice %149 {offsets = [0, 0], sizes = [8, 64], strides = [1, 1]} : vector<8x192xf32> to vector<8x64xf32>
    %151 = vector.extract_strided_slice %149 {offsets = [0, 64], sizes = [8, 64], strides = [1, 1]} : vector<8x192xf32> to vector<8x64xf32>
    %152 = vector.extract_strided_slice %149 {offsets = [0, 128], sizes = [8, 64], strides = [1, 1]} : vector<8x192xf32> to vector<8x64xf32>
    %153 = vector.extract_strided_slice %143 {offsets = [0, 192], sizes = [8, 64], strides = [1, 1]} : vector<8x256xf32> to vector<8x64xf32>
    %154 = math.tanh %153 : vector<8x64xf32>
    %155 = arith.mulf %151, %117 : vector<8x64xf32>
    %156 = arith.mulf %150, %154 : vector<8x64xf32>
    %157 = arith.addf %155, %156 : vector<8x64xf32>
    %158 = math.tanh %157 : vector<8x64xf32>
    %159 = arith.mulf %152, %158 : vector<8x64xf32>
    %160 = tpu.concatenate %159, %140 in 1 : vector<8x64xf32>, vector<8x64xf32> -> vector<8x128xf32>
    %cst_31 = arith.constant dense<0.000000e+00> : vector<8x512xf32>
    %161 = tpu.matmul %160, %11, %cst_31 {dimension_numbers = #tpu.dot_dimension_numbers<[1], [0], [0], [1], [0, 0, 1, 1], [], []>} : vector<8x128xf32>, vector<128x512xf32>, vector<8x512xf32> -> vector<8x512xf32>
    %162 = vector.extract_strided_slice %161 {offsets = [0, 256], sizes = [8, 256], strides = [1, 1]} : vector<8x512xf32> to vector<8x256xf32>
    %163 = vector.extract_strided_slice %161 {offsets = [0, 0], sizes = [8, 256], strides = [1, 1]} : vector<8x512xf32> to vector<8x256xf32>
    %164 = arith.addf %163, %3 : vector<8x256xf32>
    %165 = vector.extract_strided_slice %164 {offsets = [0, 0], sizes = [8, 192], strides = [1, 1]} : vector<8x256xf32> to vector<8x192xf32>
    %166 = arith.negf %165 : vector<8x192xf32>
    %167 = math.exp %166 : vector<8x192xf32>
    %cst_32 = arith.constant 1.000000e+00 : f32
    %168 = vector.broadcast %cst_32 : f32 to vector<8x192xf32>
    %169 = arith.addf %168, %167 : vector<8x192xf32>
    %170 = arith.divf %168, %169 : vector<8x192xf32>
    %171 = vector.extract_strided_slice %170 {offsets = [0, 0], sizes = [8, 64], strides = [1, 1]} : vector<8x192xf32> to vector<8x64xf32>
    %172 = vector.extract_strided_slice %170 {offsets = [0, 64], sizes = [8, 64], strides = [1, 1]} : vector<8x192xf32> to vector<8x64xf32>
    %173 = vector.extract_strided_slice %170 {offsets = [0, 128], sizes = [8, 64], strides = [1, 1]} : vector<8x192xf32> to vector<8x64xf32>
    %174 = vector.extract_strided_slice %164 {offsets = [0, 192], sizes = [8, 64], strides = [1, 1]} : vector<8x256xf32> to vector<8x64xf32>
    %175 = math.tanh %174 : vector<8x64xf32>
    %176 = arith.mulf %172, %138 : vector<8x64xf32>
    %177 = arith.mulf %171, %175 : vector<8x64xf32>
    %178 = arith.addf %176, %177 : vector<8x64xf32>
    %179 = math.tanh %178 : vector<8x64xf32>
    %180 = arith.mulf %173, %179 : vector<8x64xf32>
    %181 = vector.extract_strided_slice %18 {offsets = [4, 0, 0], sizes = [1, 8, 256], strides = [1, 1, 1]} : vector<8x8x256xf32> to vector<1x8x256xf32>
    %182 = vector.shape_cast %181 : vector<1x8x256xf32> to vector<8x256xf32>
    %183 = arith.addf %182, %162 : vector<8x256xf32>
    %184 = vector.extract_strided_slice %183 {offsets = [0, 0], sizes = [8, 192], strides = [1, 1]} : vector<8x256xf32> to vector<8x192xf32>
    %185 = arith.negf %184 : vector<8x192xf32>
    %186 = math.exp %185 : vector<8x192xf32>
    %cst_33 = arith.constant 1.000000e+00 : f32
    %187 = vector.broadcast %cst_33 : f32 to vector<8x192xf32>
    %188 = arith.addf %187, %186 : vector<8x192xf32>
    %189 = arith.divf %187, %188 : vector<8x192xf32>
    %190 = vector.extract_strided_slice %189 {offsets = [0, 0], sizes = [8, 64], strides = [1, 1]} : vector<8x192xf32> to vector<8x64xf32>
    %191 = vector.extract_strided_slice %189 {offsets = [0, 64], sizes = [8, 64], strides = [1, 1]} : vector<8x192xf32> to vector<8x64xf32>
    %192 = vector.extract_strided_slice %189 {offsets = [0, 128], sizes = [8, 64], strides = [1, 1]} : vector<8x192xf32> to vector<8x64xf32>
    %193 = vector.extract_strided_slice %183 {offsets = [0, 192], sizes = [8, 64], strides = [1, 1]} : vector<8x256xf32> to vector<8x64xf32>
    %194 = math.tanh %193 : vector<8x64xf32>
    %195 = arith.mulf %191, %157 : vector<8x64xf32>
    %196 = arith.mulf %190, %194 : vector<8x64xf32>
    %197 = arith.addf %195, %196 : vector<8x64xf32>
    %198 = math.tanh %197 : vector<8x64xf32>
    %199 = arith.mulf %192, %198 : vector<8x64xf32>
    %200 = tpu.concatenate %199, %180 in 1 : vector<8x64xf32>, vector<8x64xf32> -> vector<8x128xf32>
    %cst_34 = arith.constant dense<0.000000e+00> : vector<8x512xf32>
    %201 = tpu.matmul %200, %11, %cst_34 {dimension_numbers = #tpu.dot_dimension_numbers<[1], [0], [0], [1], [0, 0, 1, 1], [], []>} : vector<8x128xf32>, vector<128x512xf32>, vector<8x512xf32> -> vector<8x512xf32>
    %202 = vector.extract_strided_slice %201 {offsets = [0, 256], sizes = [8, 256], strides = [1, 1]} : vector<8x512xf32> to vector<8x256xf32>
    %203 = vector.extract_strided_slice %201 {offsets = [0, 0], sizes = [8, 256], strides = [1, 1]} : vector<8x512xf32> to vector<8x256xf32>
    %204 = arith.addf %203, %3 : vector<8x256xf32>
    %205 = vector.extract_strided_slice %204 {offsets = [0, 0], sizes = [8, 192], strides = [1, 1]} : vector<8x256xf32> to vector<8x192xf32>
    %206 = arith.negf %205 : vector<8x192xf32>
    %207 = math.exp %206 : vector<8x192xf32>
    %cst_35 = arith.constant 1.000000e+00 : f32
    %208 = vector.broadcast %cst_35 : f32 to vector<8x192xf32>
    %209 = arith.addf %208, %207 : vector<8x192xf32>
    %210 = arith.divf %208, %209 : vector<8x192xf32>
    %211 = vector.extract_strided_slice %210 {offsets = [0, 0], sizes = [8, 64], strides = [1, 1]} : vector<8x192xf32> to vector<8x64xf32>
    %212 = vector.extract_strided_slice %210 {offsets = [0, 64], sizes = [8, 64], strides = [1, 1]} : vector<8x192xf32> to vector<8x64xf32>
    %213 = vector.extract_strided_slice %210 {offsets = [0, 128], sizes = [8, 64], strides = [1, 1]} : vector<8x192xf32> to vector<8x64xf32>
    %214 = vector.extract_strided_slice %204 {offsets = [0, 192], sizes = [8, 64], strides = [1, 1]} : vector<8x256xf32> to vector<8x64xf32>
    %215 = math.tanh %214 : vector<8x64xf32>
    %216 = arith.mulf %212, %178 : vector<8x64xf32>
    %217 = arith.mulf %211, %215 : vector<8x64xf32>
    %218 = arith.addf %216, %217 : vector<8x64xf32>
    %219 = math.tanh %218 : vector<8x64xf32>
    %220 = arith.mulf %213, %219 : vector<8x64xf32>
    %221 = vector.extract_strided_slice %18 {offsets = [5, 0, 0], sizes = [1, 8, 256], strides = [1, 1, 1]} : vector<8x8x256xf32> to vector<1x8x256xf32>
    %222 = vector.shape_cast %221 : vector<1x8x256xf32> to vector<8x256xf32>
    %223 = arith.addf %222, %202 : vector<8x256xf32>
    %224 = vector.extract_strided_slice %223 {offsets = [0, 0], sizes = [8, 192], strides = [1, 1]} : vector<8x256xf32> to vector<8x192xf32>
    %225 = arith.negf %224 : vector<8x192xf32>
    %226 = math.exp %225 : vector<8x192xf32>
    %cst_36 = arith.constant 1.000000e+00 : f32
    %227 = vector.broadcast %cst_36 : f32 to vector<8x192xf32>
    %228 = arith.addf %227, %226 : vector<8x192xf32>
    %229 = arith.divf %227, %228 : vector<8x192xf32>
    %230 = vector.extract_strided_slice %229 {offsets = [0, 0], sizes = [8, 64], strides = [1, 1]} : vector<8x192xf32> to vector<8x64xf32>
    %231 = vector.extract_strided_slice %229 {offsets = [0, 64], sizes = [8, 64], strides = [1, 1]} : vector<8x192xf32> to vector<8x64xf32>
    %232 = vector.extract_strided_slice %229 {offsets = [0, 128], sizes = [8, 64], strides = [1, 1]} : vector<8x192xf32> to vector<8x64xf32>
    %233 = vector.extract_strided_slice %223 {offsets = [0, 192], sizes = [8, 64], strides = [1, 1]} : vector<8x256xf32> to vector<8x64xf32>
    %234 = math.tanh %233 : vector<8x64xf32>
    %235 = arith.mulf %231, %197 : vector<8x64xf32>
    %236 = arith.mulf %230, %234 : vector<8x64xf32>
    %237 = arith.addf %235, %236 : vector<8x64xf32>
    %238 = math.tanh %237 : vector<8x64xf32>
    %239 = arith.mulf %232, %238 : vector<8x64xf32>
    %240 = tpu.concatenate %239, %220 in 1 : vector<8x64xf32>, vector<8x64xf32> -> vector<8x128xf32>
    %cst_37 = arith.constant dense<0.000000e+00> : vector<8x512xf32>
    %241 = tpu.matmul %240, %11, %cst_37 {dimension_numbers = #tpu.dot_dimension_numbers<[1], [0], [0], [1], [0, 0, 1, 1], [], []>} : vector<8x128xf32>, vector<128x512xf32>, vector<8x512xf32> -> vector<8x512xf32>
    %242 = vector.extract_strided_slice %241 {offsets = [0, 256], sizes = [8, 256], strides = [1, 1]} : vector<8x512xf32> to vector<8x256xf32>
    %243 = vector.extract_strided_slice %241 {offsets = [0, 0], sizes = [8, 256], strides = [1, 1]} : vector<8x512xf32> to vector<8x256xf32>
    %244 = arith.addf %243, %3 : vector<8x256xf32>
    %245 = vector.extract_strided_slice %244 {offsets = [0, 0], sizes = [8, 192], strides = [1, 1]} : vector<8x256xf32> to vector<8x192xf32>
    %246 = arith.negf %245 : vector<8x192xf32>
    %247 = math.exp %246 : vector<8x192xf32>
    %cst_38 = arith.constant 1.000000e+00 : f32
    %248 = vector.broadcast %cst_38 : f32 to vector<8x192xf32>
    %249 = arith.addf %248, %247 : vector<8x192xf32>
    %250 = arith.divf %248, %249 : vector<8x192xf32>
    %251 = vector.extract_strided_slice %250 {offsets = [0, 0], sizes = [8, 64], strides = [1, 1]} : vector<8x192xf32> to vector<8x64xf32>
    %252 = vector.extract_strided_slice %250 {offsets = [0, 64], sizes = [8, 64], strides = [1, 1]} : vector<8x192xf32> to vector<8x64xf32>
    %253 = vector.extract_strided_slice %250 {offsets = [0, 128], sizes = [8, 64], strides = [1, 1]} : vector<8x192xf32> to vector<8x64xf32>
    %254 = vector.extract_strided_slice %244 {offsets = [0, 192], sizes = [8, 64], strides = [1, 1]} : vector<8x256xf32> to vector<8x64xf32>
    %255 = math.tanh %254 : vector<8x64xf32>
    %256 = arith.mulf %252, %218 : vector<8x64xf32>
    %257 = arith.mulf %251, %255 : vector<8x64xf32>
    %258 = arith.addf %256, %257 : vector<8x64xf32>
    %259 = math.tanh %258 : vector<8x64xf32>
    %260 = arith.mulf %253, %259 : vector<8x64xf32>
    %261 = vector.extract_strided_slice %18 {offsets = [6, 0, 0], sizes = [1, 8, 256], strides = [1, 1, 1]} : vector<8x8x256xf32> to vector<1x8x256xf32>
    %262 = vector.shape_cast %261 : vector<1x8x256xf32> to vector<8x256xf32>
    %263 = arith.addf %262, %242 : vector<8x256xf32>
    %264 = vector.extract_strided_slice %263 {offsets = [0, 0], sizes = [8, 192], strides = [1, 1]} : vector<8x256xf32> to vector<8x192xf32>
    %265 = arith.negf %264 : vector<8x192xf32>
    %266 = math.exp %265 : vector<8x192xf32>
    %cst_39 = arith.constant 1.000000e+00 : f32
    %267 = vector.broadcast %cst_39 : f32 to vector<8x192xf32>
    %268 = arith.addf %267, %266 : vector<8x192xf32>
    %269 = arith.divf %267, %268 : vector<8x192xf32>
    %270 = vector.extract_strided_slice %269 {offsets = [0, 0], sizes = [8, 64], strides = [1, 1]} : vector<8x192xf32> to vector<8x64xf32>
    %271 = vector.extract_strided_slice %269 {offsets = [0, 64], sizes = [8, 64], strides = [1, 1]} : vector<8x192xf32> to vector<8x64xf32>
    %272 = vector.extract_strided_slice %269 {offsets = [0, 128], sizes = [8, 64], strides = [1, 1]} : vector<8x192xf32> to vector<8x64xf32>
    %273 = vector.extract_strided_slice %263 {offsets = [0, 192], sizes = [8, 64], strides = [1, 1]} : vector<8x256xf32> to vector<8x64xf32>
    %274 = math.tanh %273 : vector<8x64xf32>
    %275 = arith.mulf %271, %237 : vector<8x64xf32>
    %276 = arith.mulf %270, %274 : vector<8x64xf32>
    %277 = arith.addf %275, %276 : vector<8x64xf32>
    %278 = math.tanh %277 : vector<8x64xf32>
    %279 = arith.mulf %272, %278 : vector<8x64xf32>
    %280 = tpu.concatenate %279, %260 in 1 : vector<8x64xf32>, vector<8x64xf32> -> vector<8x128xf32>
    %cst_40 = arith.constant dense<0.000000e+00> : vector<8x512xf32>
    %281 = tpu.matmul %280, %11, %cst_40 {dimension_numbers = #tpu.dot_dimension_numbers<[1], [0], [0], [1], [0, 0, 1, 1], [], []>} : vector<8x128xf32>, vector<128x512xf32>, vector<8x512xf32> -> vector<8x512xf32>
    %282 = vector.extract_strided_slice %281 {offsets = [0, 256], sizes = [8, 256], strides = [1, 1]} : vector<8x512xf32> to vector<8x256xf32>
    %283 = vector.extract_strided_slice %281 {offsets = [0, 0], sizes = [8, 256], strides = [1, 1]} : vector<8x512xf32> to vector<8x256xf32>
    %284 = arith.addf %283, %3 : vector<8x256xf32>
    %285 = vector.extract_strided_slice %284 {offsets = [0, 0], sizes = [8, 192], strides = [1, 1]} : vector<8x256xf32> to vector<8x192xf32>
    %286 = arith.negf %285 : vector<8x192xf32>
    %287 = math.exp %286 : vector<8x192xf32>
    %cst_41 = arith.constant 1.000000e+00 : f32
    %288 = vector.broadcast %cst_41 : f32 to vector<8x192xf32>
    %289 = arith.addf %288, %287 : vector<8x192xf32>
    %290 = arith.divf %288, %289 : vector<8x192xf32>
    %291 = vector.extract_strided_slice %290 {offsets = [0, 0], sizes = [8, 64], strides = [1, 1]} : vector<8x192xf32> to vector<8x64xf32>
    %292 = vector.extract_strided_slice %290 {offsets = [0, 64], sizes = [8, 64], strides = [1, 1]} : vector<8x192xf32> to vector<8x64xf32>
    %293 = vector.extract_strided_slice %290 {offsets = [0, 128], sizes = [8, 64], strides = [1, 1]} : vector<8x192xf32> to vector<8x64xf32>
    %294 = vector.extract_strided_slice %284 {offsets = [0, 192], sizes = [8, 64], strides = [1, 1]} : vector<8x256xf32> to vector<8x64xf32>
    %295 = math.tanh %294 : vector<8x64xf32>
    %296 = arith.mulf %292, %258 : vector<8x64xf32>
    %297 = arith.mulf %291, %295 : vector<8x64xf32>
    %298 = arith.addf %296, %297 : vector<8x64xf32>
    %299 = math.tanh %298 : vector<8x64xf32>
    %300 = arith.mulf %293, %299 : vector<8x64xf32>
    %301 = vector.extract_strided_slice %18 {offsets = [7, 0, 0], sizes = [1, 8, 256], strides = [1, 1, 1]} : vector<8x8x256xf32> to vector<1x8x256xf32>
    %302 = vector.shape_cast %301 : vector<1x8x256xf32> to vector<8x256xf32>
    %303 = arith.addf %302, %282 : vector<8x256xf32>
    %304 = vector.extract_strided_slice %303 {offsets = [0, 0], sizes = [8, 192], strides = [1, 1]} : vector<8x256xf32> to vector<8x192xf32>
    %305 = arith.negf %304 : vector<8x192xf32>
    %306 = math.exp %305 : vector<8x192xf32>
    %cst_42 = arith.constant 1.000000e+00 : f32
    %307 = vector.broadcast %cst_42 : f32 to vector<8x192xf32>
    %308 = arith.addf %307, %306 : vector<8x192xf32>
    %309 = arith.divf %307, %308 : vector<8x192xf32>
    %310 = vector.extract_strided_slice %309 {offsets = [0, 0], sizes = [8, 64], strides = [1, 1]} : vector<8x192xf32> to vector<8x64xf32>
    %311 = vector.extract_strided_slice %309 {offsets = [0, 64], sizes = [8, 64], strides = [1, 1]} : vector<8x192xf32> to vector<8x64xf32>
    %312 = vector.extract_strided_slice %309 {offsets = [0, 128], sizes = [8, 64], strides = [1, 1]} : vector<8x192xf32> to vector<8x64xf32>
    %313 = vector.extract_strided_slice %303 {offsets = [0, 192], sizes = [8, 64], strides = [1, 1]} : vector<8x256xf32> to vector<8x64xf32>
    %314 = math.tanh %313 : vector<8x64xf32>
    %315 = arith.mulf %311, %277 : vector<8x64xf32>
    %316 = arith.mulf %310, %314 : vector<8x64xf32>
    %317 = arith.addf %315, %316 : vector<8x64xf32>
    %318 = math.tanh %317 : vector<8x64xf32>
    %319 = arith.mulf %312, %318 : vector<8x64xf32>
    %320 = tpu.concatenate %319, %300 in 1 : vector<8x64xf32>, vector<8x64xf32> -> vector<8x128xf32>
    %cst_43 = arith.constant dense<0.000000e+00> : vector<8x512xf32>
    %321 = tpu.matmul %320, %11, %cst_43 {dimension_numbers = #tpu.dot_dimension_numbers<[1], [0], [0], [1], [0, 0, 1, 1], [], []>} : vector<8x128xf32>, vector<128x512xf32>, vector<8x512xf32> -> vector<8x512xf32>
    %322 = vector.extract_strided_slice %321 {offsets = [0, 0], sizes = [8, 256], strides = [1, 1]} : vector<8x512xf32> to vector<8x256xf32>
    %323 = arith.addf %322, %3 : vector<8x256xf32>
    %324 = vector.extract_strided_slice %323 {offsets = [0, 0], sizes = [8, 192], strides = [1, 1]} : vector<8x256xf32> to vector<8x192xf32>
    %325 = arith.negf %324 : vector<8x192xf32>
    %326 = math.exp %325 : vector<8x192xf32>
    %cst_44 = arith.constant 1.000000e+00 : f32
    %327 = vector.broadcast %cst_44 : f32 to vector<8x192xf32>
    %328 = arith.addf %327, %326 : vector<8x192xf32>
    %329 = arith.divf %327, %328 : vector<8x192xf32>
    %330 = vector.extract_strided_slice %329 {offsets = [0, 0], sizes = [8, 64], strides = [1, 1]} : vector<8x192xf32> to vector<8x64xf32>
    %331 = vector.extract_strided_slice %329 {offsets = [0, 64], sizes = [8, 64], strides = [1, 1]} : vector<8x192xf32> to vector<8x64xf32>
    %332 = vector.extract_strided_slice %329 {offsets = [0, 128], sizes = [8, 64], strides = [1, 1]} : vector<8x192xf32> to vector<8x64xf32>
    %333 = vector.extract_strided_slice %323 {offsets = [0, 192], sizes = [8, 64], strides = [1, 1]} : vector<8x256xf32> to vector<8x64xf32>
    %334 = math.tanh %333 : vector<8x64xf32>
    %335 = arith.mulf %331, %298 : vector<8x64xf32>
    %336 = arith.mulf %330, %334 : vector<8x64xf32>
    %337 = arith.addf %335, %336 : vector<8x64xf32>
    %338 = math.tanh %337 : vector<8x64xf32>
    %339 = arith.mulf %332, %338 : vector<8x64xf32>
    %340 = vector.shape_cast %60 : vector<8x64xf32> to vector<1x8x64xf32>
    %341 = vector.shape_cast %100 : vector<8x64xf32> to vector<1x8x64xf32>
    %342 = vector.shape_cast %140 : vector<8x64xf32> to vector<1x8x64xf32>
    %343 = vector.shape_cast %180 : vector<8x64xf32> to vector<1x8x64xf32>
    %344 = vector.shape_cast %220 : vector<8x64xf32> to vector<1x8x64xf32>
    %345 = vector.shape_cast %260 : vector<8x64xf32> to vector<1x8x64xf32>
    %346 = vector.shape_cast %300 : vector<8x64xf32> to vector<1x8x64xf32>
    %347 = vector.shape_cast %339 : vector<8x64xf32> to vector<1x8x64xf32>
    %348 = tpu.concatenate %340, %341, %342, %343, %344, %345, %346, %347 in 0 : vector<1x8x64xf32>, vector<1x8x64xf32>, vector<1x8x64xf32>, vector<1x8x64xf32>, vector<1x8x64xf32>, vector<1x8x64xf32>, vector<1x8x64xf32>, vector<1x8x64xf32> -> vector<8x8x64xf32>
    %349 = vector.shape_cast %348 : vector<8x8x64xf32> to vector<64x64xf32>
    %cst_45 = arith.constant dense<0.000000e+00> : vector<64x64xf32>
    %350 = tpu.matmul %349, %9, %cst_45 {dimension_numbers = #tpu.dot_dimension_numbers<[1], [0], [0], [1], [0, 0, 1, 1], [], []>} : vector<64x64xf32>, vector<64x64xf32>, vector<64x64xf32> -> vector<64x64xf32>
    %351 = vector.broadcast %4 : vector<1x64xf32> to vector<64x64xf32>
    %352 = arith.addf %350, %351 : vector<64x64xf32>
    %353 = math.tanh %352 : vector<64x64xf32>
    %354 = vector.broadcast %5 : vector<1x64xf32> to vector<64x64xf32>
    %355 = arith.mulf %353, %354 : vector<64x64xf32>
    %356 = vector.shape_cast %355 : vector<64x64xf32> to vector<8x8x64xf32>
    %cst_46 = arith.constant dense<0.000000e+00> : vector<8x8xf32>
    %357 = vector.multi_reduction <add>, %356, %cst_46 [2] : vector<8x8x64xf32> to vector<8x8xf32>
    %358 = tpu.iota {dimensions = array<i32: 0>} : vector<8x8xi32>
    %c0_47 = arith.constant 0 : index
    %c0_48 = arith.constant 0 : index
    %359 = vector.load %arg1[%c0_47, %c0_48] : memref<1x8xi32, #tpu.memory_space<vmem>>, vector<1x8xi32>
    %360 = vector.broadcast %359 : vector<1x8xi32> to vector<8x8xi32>
    %361 = arith.cmpi slt, %358, %360 : vector<8x8xi32>
    %cst_49 = arith.constant -1.000000e+09 : f32
    %362 = vector.broadcast %cst_49 : f32 to vector<8x8xf32>
    %363 = arith.select %361, %357, %362 : vector<8x8xi1>, vector<8x8xf32>
    %cst_50 = arith.constant dense<0xFF800000> : vector<8xf32>
    %364 = vector.multi_reduction <maximumf>, %363, %cst_50 [0] : vector<8x8xf32> to vector<8xf32>
    %365 = vector.shape_cast %364 : vector<8xf32> to vector<1x8xf32>
    %366 = vector.broadcast %365 : vector<1x8xf32> to vector<8x8xf32>
    %367 = arith.subf %363, %366 : vector<8x8xf32>
    %368 = math.exp %367 : vector<8x8xf32>
    %cst_51 = arith.constant dense<0.000000e+00> : vector<8xf32>
    %369 = vector.multi_reduction <add>, %368, %cst_51 [0] : vector<8x8xf32> to vector<8xf32>
    %370 = vector.shape_cast %369 : vector<8xf32> to vector<1x8xf32>
    %371 = vector.broadcast %370 : vector<1x8xf32> to vector<8x8xf32>
    %372 = arith.divf %368, %371 : vector<8x8xf32>
    %373 = vector.shape_cast %372 : vector<8x8xf32> to vector<8x8x1xf32>
    %374 = vector.broadcast %373 : vector<8x8x1xf32> to vector<8x8x64xf32>
    %375 = arith.mulf %374, %348 : vector<8x8x64xf32>
    %cst_52 = arith.constant dense<0.000000e+00> : vector<8x64xf32>
    %376 = vector.multi_reduction <add>, %375, %cst_52 [0] : vector<8x8x64xf32> to vector<8x64xf32>
    %cst_53 = arith.constant dense<0.000000e+00> : vector<8xf32>
    %377 = vector.multi_reduction <add>, %376, %cst_53 [1] : vector<8x64xf32> to vector<8xf32>
    %378 = vector.shape_cast %377 : vector<8xf32> to vector<8x1xf32>
    %cst_54 = arith.constant 6.400000e+01 : f32
    %379 = vector.broadcast %cst_54 : f32 to vector<8x1xf32>
    %380 = arith.divf %378, %379 : vector<8x1xf32>
    %381 = vector.broadcast %380 : vector<8x1xf32> to vector<8x64xf32>
    %382 = arith.subf %376, %381 : vector<8x64xf32>
    %383 = arith.mulf %382, %382 : vector<8x64xf32>
    %cst_55 = arith.constant dense<0.000000e+00> : vector<8xf32>
    %384 = vector.multi_reduction <add>, %383, %cst_55 [1] : vector<8x64xf32> to vector<8xf32>
    %385 = vector.shape_cast %384 : vector<8xf32> to vector<8x1xf32>
    %cst_56 = arith.constant 6.400000e+01 : f32
    %386 = vector.broadcast %cst_56 : f32 to vector<8x1xf32>
    %387 = arith.divf %385, %386 : vector<8x1xf32>
    %388 = vector.broadcast %380 : vector<8x1xf32> to vector<8x64xf32>
    %389 = arith.subf %376, %388 : vector<8x64xf32>
    %cst_57 = arith.constant 9.99999974E-6 : f32
    %390 = vector.broadcast %cst_57 : f32 to vector<8x1xf32>
    %391 = arith.addf %387, %390 : vector<8x1xf32>
    %392 = math.rsqrt %391 : vector<8x1xf32>
    %393 = vector.broadcast %392 : vector<8x1xf32> to vector<8x64xf32>
    %394 = arith.mulf %389, %393 : vector<8x64xf32>
    %395 = vector.broadcast %6 : vector<1x64xf32> to vector<8x64xf32>
    %396 = arith.mulf %394, %395 : vector<8x64xf32>
    %397 = vector.broadcast %7 : vector<1x64xf32> to vector<8x64xf32>
    %398 = arith.addf %396, %397 : vector<8x64xf32>
    %cst_58 = arith.constant dense<0.000000e+00> : vector<8x3xf32>
    %399 = tpu.matmul %398, %10, %cst_58 {dimension_numbers = #tpu.dot_dimension_numbers<[1], [0], [0], [1], [0, 0, 1, 1], [], []>} : vector<8x64xf32>, vector<64x3xf32>, vector<8x3xf32> -> vector<8x3xf32>
    %400 = vector.broadcast %8 : vector<1x3xf32> to vector<8x3xf32>
    %401 = arith.addf %399, %400 : vector<8x3xf32>
    %c0_59 = arith.constant 0 : index
    %c0_60 = arith.constant 0 : index
    %402 = vector.load %arg7[%c0_59, %c0_60] : memref<8x3xf32, #tpu.memory_space<vmem>>, vector<8x3xf32>
    tpu.vector_store %arg7[%c0_59, %c0_60], %401 {strides = array<i32>} : memref<8x3xf32, #tpu.memory_space<vmem>>, vector<8x3xf32>,
    return
  }
}

</mosaic_0001>

<llo_original>
// kernel: hockey_forward.1
$region0: #{hockey_forward.1}
  #allocation0 [shape = 'u32[]', space=smem, size = 0x4, offset = 0x4, fixed_abs, tag = 'smem constant byte address 0x4 - core index']
  #allocation1 [shape = 'u32[144,128]{1,0:T(1,128)}', space=vmem, size = 0x12000, scoped, tag = 'internal scratch']
  %s0 = inlined_call_operand.vmem [shape: f32[8,8,32], index: 0, kind: input, shape index: {}]
  %s1 = inlined_call_operand.vmem [shape: s32[1,8], index: 1, kind: input, shape index: {}]
  %s2 = inlined_call_operand.vmem [shape: f32[32,256], index: 2, kind: input, shape index: {}]
  %s3 = inlined_call_operand.vmem [shape: f32[128,512], index: 3, kind: input, shape index: {}]
  %s4 = inlined_call_operand.vmem [shape: f32[2,256], index: 4, kind: input, shape index: {}]
  %s5 = inlined_call_operand.vmem [shape: f32[5,64], index: 5, kind: input, shape index: {}]
  %s6 = inlined_call_operand.vmem [shape: f32[64,67], index: 6, kind: input, shape index: {}]
  %s7 = inlined_call_operand.vmem [shape: f32[8,3], index: 7, kind: output, shape index: {}]
  %s8 = sld [smem:[#allocation0]]
  $region38: #{hockey_forward.1} parent=0
    _
  %s10 = ssub.s32 1, %s8
  %s11 = scalar_select 0, %s10, %s8
  // Predicated region
  $region2: #{hockey_forward.1} parent=0 // pred_check
    _
  $region3: #{hockey_forward.1} parent=0 // pred_check_branch
    %13 = sbr.rel (0) target = $region5
  $region4: #{hockey_forward.1} parent=0 // pred_region
    _
  $region5: #{hockey_forward.1} parent=0 // pred_fallthru
    _
  // Predicated region
  $region6: #{hockey_forward.1} parent=0 // pred_check
    _
  $region7: #{hockey_forward.1} parent=0 // pred_check_branch
    %15 = sbr.rel (0) target = $region9
  $region8: #{hockey_forward.1} parent=0 // pred_region
    _
  $region9: #{hockey_forward.1} parent=0 // pred_fallthru
    _
  // Predicated region
  $region10: #{hockey_forward.1} parent=0 // pred_check
    _
  $region11: #{hockey_forward.1} parent=0 // pred_check_branch
    %17 = sbr.rel (0) target = $region13
  $region12: #{hockey_forward.1} parent=0 // pred_region
    _
  $region13: #{hockey_forward.1} parent=0 // pred_fallthru
    _
  // Predicated region
  $region14: #{hockey_forward.1} parent=0 // pred_check
    _
  $region15: #{hockey_forward.1} parent=0 // pred_check_branch
    %19 = sbr.rel (0) target = $region17
  $region16: #{hockey_forward.1} parent=0 // pred_region
    _
  $region17: #{hockey_forward.1} parent=0 // pred_fallthru
    _
  // Predicated region
  $region18: #{hockey_forward.1} parent=0 // pred_check
    _
  $region19: #{hockey_forward.1} parent=0 // pred_check_branch
    %21 = sbr.rel (0) target = $region21
  $region20: #{hockey_forward.1} parent=0 // pred_region
    _
  $region21: #{hockey_forward.1} parent=0 // pred_fallthru
    _
  // Predicated region
  $region22: #{hockey_forward.1} parent=0 // pred_check
    _
  $region23: #{hockey_forward.1} parent=0 // pred_check_branch
    %23 = sbr.rel (0) target = $region25
  $region24: #{hockey_forward.1} parent=0 // pred_region
    _
  $region25: #{hockey_forward.1} parent=0 // pred_fallthru
    _
  // Predicated region
  $region26: #{hockey_forward.1} parent=0 // pred_check
    _
  $region27: #{hockey_forward.1} parent=0 // pred_check_branch
    %25 = sbr.rel (0) target = $region29
  $region28: #{hockey_forward.1} parent=0 // pred_region
    _
  $region29: #{hockey_forward.1} parent=0 // pred_fallthru
    _
  %v26 = vld [vmem:[%s4] ss:$2 sm:$0x3]
  %s27 = scalar_lea.vmem %s4, 1
  %v28 = vld [vmem:[%s27] ss:$2 sm:$0x3]
  %v30 = vlaneseq
  %v31 = vshrl.u32 %v30, 7
  %v32 = vsub.s32 0, %v31
  %v33 = vrot.slane %v28, %v32
  %v34 = vlaneseq
  %v35 = vshrl.u32 %v34, 7
  %v36 = vsub.s32 1, %v35
  %v37 = vrot.slane %v28, %v36
  %v40 = vld [vmem:[%s5] sm:$0x1]
  %v41 = vld [vmem:[%s5 + $0x1] sm:$0x1]
  %v42 = vld [vmem:[%s5 + $0x2] sm:$0x1]
  %v43 = vld [vmem:[%s5 + $0x3] sm:$0x1]
  %v44 = vld [vmem:[%s5 + $0x4] sm:$0x1]
  %v45 = vld [vmem:[%s6] sm:$0xff]
  %v46 = vld [vmem:[%s6 + $0x8] sm:$0xff]
  %v47 = vld [vmem:[%s6 + $0x10] sm:$0xff]
  %v48 = vld [vmem:[%s6 + $0x18] sm:$0xff]
  %v49 = vld [vmem:[%s6 + $0x20] sm:$0xff]
  %v50 = vld [vmem:[%s6 + $0x28] sm:$0xff]
  %v51 = vld [vmem:[%s6 + $0x30] sm:$0xff]
  %v52 = vld [vmem:[%s6 + $0x38] sm:$0xff]
  %v53 = vld [vmem:[%s3] sm:$0xff]
  %v54 = vld [vmem:[%s3 + $0x8] sm:$0xff]
  %v55 = vld [vmem:[%s3 + $0x10] sm:$0xff]
  %v56 = vld [vmem:[%s3 + $0x18] sm:$0xff]
  %v57 = vld [vmem:[%s3 + $0x20] sm:$0xff]
  %v58 = vld [vmem:[%s3 + $0x28] sm:$0xff]
  %v59 = vld [vmem:[%s3 + $0x30] sm:$0xff]
  %v60 = vld [vmem:[%s3 + $0x38] sm:$0xff]
  %v61 = vld [vmem:[%s3 + $0x40] sm:$0xff]
  %v62 = vld [vmem:[%s3 + $0x48] sm:$0xff]
  %v63 = vld [vmem:[%s3 + $0x50] sm:$0xff]
  %v64 = vld [vmem:[%s3 + $0x58] sm:$0xff]
  %v65 = vld [vmem:[%s3 + $0x60] sm:$0xff]
  %v66 = vld [vmem:[%s3 + $0x68] sm:$0xff]
  %v67 = vld [vmem:[%s3 + $0x70] sm:$0xff]
  %v68 = vld [vmem:[%s3 + $0x78] sm:$0xff]
  %v69 = vld [vmem:[%s3 + $0x80] sm:$0xff]
  %v70 = vld [vmem:[%s3 + $0x88] sm:$0xff]
  %v71 = vld [vmem:[%s3 + $0x90] sm:$0xff]
  %v72 = vld [vmem:[%s3 + $0x98] sm:$0xff]
  %v73 = vld [vmem:[%s3 + $0xa0] sm:$0xff]
  %v74 = vld [vmem:[%s3 + $0xa8] sm:$0xff]
  %v75 = vld [vmem:[%s3 + $0xb0] sm:$0xff]
  %v76 = vld [vmem:[%s3 + $0xb8] sm:$0xff]
  %v77 = vld [vmem:[%s3 + $0xc0] sm:$0xff]
  %v78 = vld [vmem:[%s3 + $0xc8] sm:$0xff]
  %v79 = vld [vmem:[%s3 + $0xd0] sm:$0xff]
  %v80 = vld [vmem:[%s3 + $0xd8] sm:$0xff]
  %v81 = vld [vmem:[%s3 + $0xe0] sm:$0xff]
  %v82 = vld [vmem:[%s3 + $0xe8] sm:$0xff]
  %v83 = vld [vmem:[%s3 + $0xf0] sm:$0xff]
  %v84 = vld [vmem:[%s3 + $0xf8] sm:$0xff]
  %v85 = vld [vmem:[%s3 + $0x100] sm:$0xff]
  %v86 = vld [vmem:[%s3 + $0x108] sm:$0xff]
  %v87 = vld [vmem:[%s3 + $0x110] sm:$0xff]
  %v88 = vld [vmem:[%s3 + $0x118] sm:$0xff]
  %v89 = vld [vmem:[%s3 + $0x120] sm:$0xff]
  %v90 = vld [vmem:[%s3 + $0x128] sm:$0xff]
  %v91 = vld [vmem:[%s3 + $0x130] sm:$0xff]
  %v92 = vld [vmem:[%s3 + $0x138] sm:$0xff]
  %v93 = vld [vmem:[%s3 + $0x140] sm:$0xff]
  %v94 = vld [vmem:[%s3 + $0x148] sm:$0xff]
  %v95 = vld [vmem:[%s3 + $0x150] sm:$0xff]
  %v96 = vld [vmem:[%s3 + $0x158] sm:$0xff]
  %v97 = vld [vmem:[%s3 + $0x160] sm:$0xff]
  %v98 = vld [vmem:[%s3 + $0x168] sm:$0xff]
  %v99 = vld [vmem:[%s3 + $0x170] sm:$0xff]
  %v100 = vld [vmem:[%s3 + $0x178] sm:$0xff]
  %v101 = vld [vmem:[%s3 + $0x180] sm:$0xff]
  %v102 = vld [vmem:[%s3 + $0x188] sm:$0xff]
  %v103 = vld [vmem:[%s3 + $0x190] sm:$0xff]
  %v104 = vld [vmem:[%s3 + $0x198] sm:$0xff]
  %v105 = vld [vmem:[%s3 + $0x1a0] sm:$0xff]
  %v106 = vld [vmem:[%s3 + $0x1a8] sm:$0xff]
  %v107 = vld [vmem:[%s3 + $0x1b0] sm:$0xff]
  %v108 = vld [vmem:[%s3 + $0x1b8] sm:$0xff]
  %v109 = vld [vmem:[%s3 + $0x1c0] sm:$0xff]
  %v110 = vld [vmem:[%s3 + $0x1c8] sm:$0xff]
  %v111 = vld [vmem:[%s3 + $0x1d0] sm:$0xff]
  %v112 = vld [vmem:[%s3 + $0x1d8] sm:$0xff]
  %v113 = vld [vmem:[%s3 + $0x1e0] sm:$0xff]
  %v114 = vld [vmem:[%s3 + $0x1e8] sm:$0xff]
  %v115 = vld [vmem:[%s3 + $0x1f0] sm:$0xff]
  %v116 = vld [vmem:[%s3 + $0x1f8] sm:$0xff]
  %v117 = vld [vmem:[%s0] sm:$0xff]
  %v118 = vld [vmem:[%s0 + $0x8] sm:$0xff]
  %v119 = vld [vmem:[%s0 + $0x10] sm:$0xff]
  %v120 = vld [vmem:[%s0 + $0x18] sm:$0xff]
  %v121 = vld [vmem:[%s0 + $0x20] sm:$0xff]
  %v122 = vld [vmem:[%s0 + $0x28] sm:$0xff]
  %v123 = vld [vmem:[%s0 + $0x30] sm:$0xff]
  %v124 = vld [vmem:[%s0 + $0x38] sm:$0xff]
  %v125 = vld [vmem:[%s2] sm:$0xff]
  %v126 = vld [vmem:[%s2 + $0x8] sm:$0xff]
  %v127 = vld [vmem:[%s2 + $0x10] sm:$0xff]
  %v128 = vld [vmem:[%s2 + $0x18] sm:$0xff]
  %v129 = vld [vmem:[%s2 + $0x20] sm:$0xff]
  %v130 = vld [vmem:[%s2 + $0x28] sm:$0xff]
  %v131 = vld [vmem:[%s2 + $0x30] sm:$0xff]
  %v132 = vld [vmem:[%s2 + $0x38] sm:$0xff]
  %v134 = vlaneseq
  %v135 = vshrl.u32 %v134, 7
  %v136 = vsub.s32 0, %v135
  %v137 = vrot.slane %v26, %v136
  %v138 = vlaneseq
  %v139 = vshrl.u32 %v138, 7
  %v140 = vsub.s32 1, %v139
  %v141 = vrot.slane %v26, %v140
  %vm144 = vcmask 261120
  %v146 = vsel %vm144, %v117, 0
  %v149 = vsel %vm144, %v118, 0
  %v152 = vsel %vm144, %v119, 0
  %v155 = vsel %vm144, %v120, 0
  %v158 = vsel %vm144, %v121, 0
  %v161 = vsel %vm144, %v122, 0
  %v164 = vsel %vm144, %v123, 0
  %v167 = vsel %vm144, %v124, 0
  %169 = vmatprep.subr.mxu0 %v126
  %170 = vmatpush1.msra.mxu0 %v125
  %171 = vmatprep.subr.mxu0 %v128
  %172 = vmatpush1.msra.mxu0 %v127
  %173 = vmatprep.subr.mxu0 %v130
  %174 = vmatpush1.msra.mxu0 %v129
  %175 = vmatprep.subr.mxu0 %v132
  %176 = vmatpush1.msra.mxu0 %v131
  %177 = vmatprep.subr.mxu0 0.0
  %178 = vmatpush1.msra.mxu0 0.0
  %179 = vmatprep.subr.mxu0 0.0
  %180 = vmatpush1.msra.mxu0 0.0
  %181 = vmatprep.subr.mxu0 0.0
  %182 = vmatpush1.msra.mxu0 0.0
  %183 = vmatprep.subr.mxu0 0.0
  %184 = vmatpush1.msra.mxu0 0.0
  %185 = vmatprep.subr.mxu0 0.0
  %186 = vmatpush1.msra.mxu0 0.0
  %187 = vmatprep.subr.mxu0 0.0
  %188 = vmatpush1.msra.mxu0 0.0
  %189 = vmatprep.subr.mxu0 0.0
  %190 = vmatpush1.msra.mxu0 0.0
  %191 = vmatprep.subr.mxu0 0.0
  %192 = vmatpush1.msra.mxu0 0.0
  %193 = vmatprep.subr.mxu0 0.0
  %194 = vmatpush1.msra.mxu0 0.0
  %195 = vmatprep.subr.mxu0 0.0
  %196 = vmatpush1.msra.mxu0 0.0
  %197 = vmatprep.subr.mxu0 0.0
  %198 = vmatpush1.msra.mxu0 0.0
  %199 = vmatprep.subr.mxu0 0.0
  %200 = vmatpush1.msra.mxu0 0.0
  %201 = vmatprep.subr.mxu0 0.0
  %202 = vmatpush1.msra.mxu0 0.0
  %203 = vmatprep.subr.mxu0 0.0
  %204 = vmatpush1.msra.mxu0 0.0
  %205 = vmatprep.subr.mxu0 0.0
  %206 = vmatpush1.msra.mxu0 0.0
  %207 = vmatprep.subr.mxu0 0.0
  %208 = vmatpush1.msra.mxu0 0.0
  %209 = vmatprep.subr.mxu0 0.0
  %210 = vmatpush1.msra.mxu0 0.0
  %211 = vmatprep.subr.mxu0 0.0
  %212 = vmatpush1.msra.mxu0 0.0
  %213 = vmatprep.subr.mxu0 0.0
  %214 = vmatpush1.msra.mxu0 0.0
  %215 = vmatprep.subr.mxu0 0.0
  %216 = vmatpush1.msra.mxu0 0.0
  %217 = vmatprep.subr.mxu0 0.0
  %218 = vmatpush1.msra.mxu0 0.0
  %219 = vmatprep.subr.mxu0 0.0
  %220 = vmatpush1.msra.mxu0 0.0
  %221 = vmatprep.subr.mxu0 0.0
  %222 = vmatpush1.msra.mxu0 0.0
  %223 = vmatprep.subr.mxu0 0.0
  %224 = vmatpush1.msra.mxu0 0.0
  %225 = vmatprep.subr.mxu0 0.0
  %226 = vmatpush1.msra.mxu0 0.0
  %227 = vmatprep.subr.mxu0 0.0
  %228 = vmatpush1.msra.mxu0 0.0
  %229 = vmatprep.subr.mxu0 0.0
  %230 = vmatpush1.msra.mxu0 0.0
  %231 = vmatprep.subr.mxu0 0.0
  %232 = vmatpush1.msra.mxu0 0.0
  %233 = vmatprep.mubr.f32.mxu0 0.0
  %234 = vmatmul.mubr.f32.gmra.mrb[0].mxu0 %v146
  %v235 = vpop.f32.mrb[0].mxu0
  %v236 = vadd.f32 %v137, %v235
  %v237 = vpop.f32.mrb[0].mxu0
  %v238 = vadd.f32 %v141, %v237
  %239 = vmatprep.mubr.f32.mxu0 0.0
  %240 = vmatmul.mubr.f32.gmra.mrb[0].mxu0 %v149
  %v241 = vpop.f32.mrb[0].mxu0
  %v242 = vadd.f32 %v137, %v241
  %v243 = vpop.f32.mrb[0].mxu0
  %v244 = vadd.f32 %v141, %v243
  %245 = vmatprep.mubr.f32.mxu0 0.0
  %246 = vmatmul.mubr.f32.gmra.mrb[0].mxu0 %v152
  %v247 = vpop.f32.mrb[0].mxu0
  %v248 = vadd.f32 %v137, %v247
  %v249 = vpop.f32.mrb[0].mxu0
  %v250 = vadd.f32 %v141, %v249
  %251 = vmatprep.mubr.f32.mxu0 0.0
  %252 = vmatmul.mubr.f32.gmra.mrb[0].mxu0 %v155
  %v253 = vpop.f32.mrb[0].mxu0
  %v254 = vadd.f32 %v137, %v253
  %v255 = vpop.f32.mrb[0].mxu0
  %v256 = vadd.f32 %v141, %v255
  %257 = vmatprep.mubr.f32.mxu0 0.0
  %258 = vmatmul.mubr.f32.gmra.mrb[0].mxu0 %v158
  %v259 = vpop.f32.mrb[0].mxu0
  %v260 = vadd.f32 %v137, %v259
  %v261 = vpop.f32.mrb[0].mxu0
  %v262 = vadd.f32 %v141, %v261
  %263 = vmatprep.mubr.f32.mxu0 0.0
  %264 = vmatmul.mubr.f32.gmra.mrb[0].mxu0 %v161
  %v265 = vpop.f32.mrb[0].mxu0
  %v266 = vadd.f32 %v137, %v265
  %v267 = vpop.f32.mrb[0].mxu0
  %v268 = vadd.f32 %v141, %v267
  %269 = vmatprep.mubr.f32.mxu0 0.0
  %270 = vmatmul.mubr.f32.gmra.mrb[0].mxu0 %v164
  %v271 = vpop.f32.mrb[0].mxu0
  %v272 = vadd.f32 %v137, %v271
  %v273 = vpop.f32.mrb[0].mxu0
  %v274 = vadd.f32 %v141, %v273
  %275 = vmatprep.mubr.f32.mxu0 0.0
  %276 = vmatmul.mubr.f32.gmra.mrb[0].mxu0 %v167
  %v277 = vpop.f32.mrb[0].mxu0
  %v278 = vadd.f32 %v137, %v277
  %v279 = vpop.f32.mrb[0].mxu0
  %v280 = vadd.f32 %v141, %v279
  %281 = vdwg.mxu0
  %v282 = vadd.f32 %v236, 0.0
  %v283 = vadd.f32 %v238, 0.0
  %v284 = vxor.u32 %v282, 2147483648
  %v285 = vxor.u32 %v283, 2147483648
  %v286 = vmul.f32 %v284, 1.442695
  %v287 = vpow.pop %v286
  %v288 = vmul.f32 %v285, 1.442695
  %v289 = vpow.pop %v288
  %v290 = vadd.f32 %v287, 1.0
  %v291 = vadd.f32 %v289, 1.0
  %v292 = vrcp.pop %v290
  %v293 = vmul.f32 1.0, %v292
  %v294 = vrcp.pop %v291
  %v295 = vmul.f32 1.0, %v294
  %v296 = vtanh.pop %v283
  %v297 = vmul.f32 %v293, 0.0
  %299 = vrot.lane.b32.xlu0 %v296, 64
  %v300 = vpop.permute.xlu0 %299
  %v302 = vmul.f32 %v293, %v300
  %304 = vrot.lane.b32.xlu0 %v302, 64
  %v305 = vpop.permute.xlu0 %304
  %v307 = vadd.f32 %v297, %v305
  %v308 = vtanh.pop %v307
  %310 = vrot.lane.b32.xlu0 %v308, 64
  %v311 = vpop.permute.xlu0 %310
  %v313 = vmul.f32 %v295, %v311
  %vm314 = vcmask 523264
  %v315 = vsel %vm314, %v313, 0.0
  %316 = vmatprep.subr.mxu0 %v54
  %317 = vmatpush1.msra.mxu0 %v53
  %318 = vmatprep.subr.mxu0 %v58
  %319 = vmatpush1.msra.mxu0 %v57
  %320 = vmatprep.subr.mxu0 %v62
  %321 = vmatpush1.msra.mxu0 %v61
  %322 = vmatprep.subr.mxu0 %v66
  %323 = vmatpush1.msra.mxu0 %v65
  %324 = vmatprep.subr.mxu0 %v70
  %325 = vmatpush1.msra.mxu0 %v69
  %326 = vmatprep.subr.mxu0 %v74
  %327 = vmatpush1.msra.mxu0 %v73
  %328 = vmatprep.subr.mxu0 %v78
  %329 = vmatpush1.msra.mxu0 %v77
  %330 = vmatprep.subr.mxu0 %v82
  %331 = vmatpush1.msra.mxu0 %v81
  %332 = vmatprep.subr.mxu0 %v86
  %333 = vmatpush1.msra.mxu0 %v85
  %334 = vmatprep.subr.mxu0 %v90
  %335 = vmatpush1.msra.mxu0 %v89
  %336 = vmatprep.subr.mxu0 %v94
  %337 = vmatpush1.msra.mxu0 %v93
  %338 = vmatprep.subr.mxu0 %v98
  %339 = vmatpush1.msra.mxu0 %v97
  %340 = vmatprep.subr.mxu0 %v102
  %341 = vmatpush1.msra.mxu0 %v101
  %342 = vmatprep.subr.mxu0 %v106
  %343 = vmatpush1.msra.mxu0 %v105
  %344 = vmatprep.subr.mxu0 %v110
  %345 = vmatpush1.msra.mxu0 %v109
  %346 = vmatprep.subr.mxu0 %v114
  %347 = vmatpush1.msra.mxu0 %v113
  %348 = vmatprep.subr.mxu0 0.0
  %349 = vmatpush1.msra.mxu0 0.0
  %350 = vmatprep.subr.mxu0 0.0
  %351 = vmatpush1.msra.mxu0 0.0
  %352 = vmatprep.subr.mxu0 0.0
  %353 = vmatpush1.msra.mxu0 0.0
  %354 = vmatprep.subr.mxu0 0.0
  %355 = vmatpush1.msra.mxu0 0.0
  %356 = vmatprep.subr.mxu0 0.0
  %357 = vmatpush1.msra.mxu0 0.0
  %358 = vmatprep.subr.mxu0 0.0
  %359 = vmatpush1.msra.mxu0 0.0
  %360 = vmatprep.subr.mxu0 0.0
  %361 = vmatpush1.msra.mxu0 0.0
  %362 = vmatprep.subr.mxu0 0.0
  %363 = vmatpush1.msra.mxu0 0.0
  %364 = vmatprep.subr.mxu0 0.0
  %365 = vmatpush1.msra.mxu0 0.0
  %366 = vmatprep.subr.mxu0 0.0
  %367 = vmatpush1.msra.mxu0 0.0
  %368 = vmatprep.subr.mxu0 0.0
  %369 = vmatpush1.msra.mxu0 0.0
  %370 = vmatprep.subr.mxu0 0.0
  %371 = vmatpush1.msra.mxu0 0.0
  %372 = vmatprep.subr.mxu0 0.0
  %373 = vmatpush1.msra.mxu0 0.0
  %374 = vmatprep.subr.mxu0 0.0
  %375 = vmatpush1.msra.mxu0 0.0
  %376 = vmatprep.subr.mxu0 0.0
  %377 = vmatpush1.msra.mxu0 0.0
  %378 = vmatprep.subr.mxu0 0.0
  %379 = vmatpush1.msra.mxu0 0.0
  %380 = vmatprep.mubr.f32.mxu0 0.0
  %381 = vmatmul.mubr.f32.gmra.mrb[0].mxu0 %v315
  %v382 = vpop.f32.mrb[0].mxu0
  %v383 = vadd.f32 0.0, %v382
  %v384 = vpop.f32.mrb[0].mxu0
  %v385 = vadd.f32 0.0, %v384
  %386 = vdwg.mxu0
  %387 = vmatprep.subr.mxu0 %v56
  %388 = vmatpush1.msra.mxu0 %v55
  %389 = vmatprep.subr.mxu0 %v60
  %390 = vmatpush1.msra.mxu0 %v59
  %391 = vmatprep.subr.mxu0 %v64
  %392 = vmatpush1.msra.mxu0 %v63
  %393 = vmatprep.subr.mxu0 %v68
  %394 = vmatpush1.msra.mxu0 %v67
  %395 = vmatprep.subr.mxu0 %v72
  %396 = vmatpush1.msra.mxu0 %v71
  %397 = vmatprep.subr.mxu0 %v76
  %398 = vmatpush1.msra.mxu0 %v75
  %399 = vmatprep.subr.mxu0 %v80
  %400 = vmatpush1.msra.mxu0 %v79
  %401 = vmatprep.subr.mxu0 %v84
  %402 = vmatpush1.msra.mxu0 %v83
  %403 = vmatprep.subr.mxu0 %v88
  %404 = vmatpush1.msra.mxu0 %v87
  %405 = vmatprep.subr.mxu0 %v92
  %406 = vmatpush1.msra.mxu0 %v91
  %407 = vmatprep.subr.mxu0 %v96
  %408 = vmatpush1.msra.mxu0 %v95
  %409 = vmatprep.subr.mxu0 %v100
  %410 = vmatpush1.msra.mxu0 %v99
  %411 = vmatprep.subr.mxu0 %v104
  %412 = vmatpush1.msra.mxu0 %v103
  %413 = vmatprep.subr.mxu0 %v108
  %414 = vmatpush1.msra.mxu0 %v107
  %415 = vmatprep.subr.mxu0 %v112
  %416 = vmatpush1.msra.mxu0 %v111
  %417 = vmatprep.subr.mxu0 %v116
  %418 = vmatpush1.msra.mxu0 %v115
  %419 = vmatprep.subr.mxu0 0.0
  %420 = vmatpush1.msra.mxu0 0.0
  %421 = vmatprep.subr.mxu0 0.0
  %422 = vmatpush1.msra.mxu0 0.0
  %423 = vmatprep.subr.mxu0 0.0
  %424 = vmatpush1.msra.mxu0 0.0
  %425 = vmatprep.subr.mxu0 0.0
  %426 = vmatpush1.msra.mxu0 0.0
  %427 = vmatprep.subr.mxu0 0.0
  %428 = vmatpush1.msra.mxu0 0.0
  %429 = vmatprep.subr.mxu0 0.0
  %430 = vmatpush1.msra.mxu0 0.0
  %431 = vmatprep.subr.mxu0 0.0
  %432 = vmatpush1.msra.mxu0 0.0
  %433 = vmatprep.subr.mxu0 0.0
  %434 = vmatpush1.msra.mxu0 0.0
  %435 = vmatprep.subr.mxu0 0.0
  %436 = vmatpush1.msra.mxu0 0.0
  %437 = vmatprep.subr.mxu0 0.0
  %438 = vmatpush1.msra.mxu0 0.0
  %439 = vmatprep.subr.mxu0 0.0
  %440 = vmatpush1.msra.mxu0 0.0
  %441 = vmatprep.subr.mxu0 0.0
  %442 = vmatpush1.msra.mxu0 0.0
  %443 = vmatprep.subr.mxu0 0.0
  %444 = vmatpush1.msra.mxu0 0.0
  %445 = vmatprep.subr.mxu0 0.0
  %446 = vmatpush1.msra.mxu0 0.0
  %447 = vmatprep.subr.mxu0 0.0
  %448 = vmatpush1.msra.mxu0 0.0
  %449 = vmatprep.subr.mxu0 0.0
  %450 = vmatpush1.msra.mxu0 0.0
  %451 = vmatprep.mubr.f32.mxu0 0.0
  %452 = vmatmul.mubr.f32.gmra.mrb[0].mxu0 %v315
  %v453 = vpop.f32.mrb[0].mxu0
  %v454 = vadd.f32 0.0, %v453
  %v455 = vpop.f32.mrb[0].mxu0
  %v456 = vadd.f32 0.0, %v455
  %457 = vdwg.mxu0
  %v458 = vadd.f32 %v383, %v33
  %v459 = vadd.f32 %v385, %v37
  %v460 = vxor.u32 %v458, 2147483648
  %v461 = vxor.u32 %v459, 2147483648
  %v462 = vmul.f32 %v460, 1.442695
  %v463 = vpow.pop %v462
  %v464 = vmul.f32 %v461, 1.442695
  %v465 = vpow.pop %v464
  %v466 = vadd.f32 %v463, 1.0
  %v467 = vadd.f32 %v465, 1.0
  %v468 = vrcp.pop %v466
  %v469 = vmul.f32 1.0, %v468
  %v470 = vrcp.pop %v467
  %v471 = vmul.f32 1.0, %v470
  %v472 = vtanh.pop %v459
  %v473 = vmul.f32 %v469, 0.0
  %475 = vrot.lane.b32.xlu0 %v472, 64
  %v476 = vpop.permute.xlu0 %475
  %v478 = vmul.f32 %v469, %v476
  %480 = vrot.lane.b32.xlu0 %v478, 64
  %v481 = vpop.permute.xlu0 %480
  %v483 = vadd.f32 %v473, %v481
  %v484 = vtanh.pop %v483
  %486 = vrot.lane.b32.xlu0 %v484, 64
  %v487 = vpop.permute.xlu0 %486
  %v489 = vmul.f32 %v471, %v487
  %v490 = vadd.f32 %v242, %v454
  %v491 = vadd.f32 %v244, %v456
  %v492 = vxor.u32 %v490, 2147483648
  %v493 = vxor.u32 %v491, 2147483648
  %v494 = vmul.f32 %v492, 1.442695
  %v495 = vpow.pop %v494
  %v496 = vmul.f32 %v493, 1.442695
  %v497 = vpow.pop %v496
  %v498 = vadd.f32 %v495, 1.0
  %v499 = vadd.f32 %v497, 1.0
  %v500 = vrcp.pop %v498
  %v501 = vmul.f32 1.0, %v500
  %v502 = vrcp.pop %v499
  %v503 = vmul.f32 1.0, %v502
  %v504 = vtanh.pop %v491
  %v505 = vmul.f32 %v501, %v307
  %507 = vrot.lane.b32.xlu0 %v504, 64
  %v508 = vpop.permute.xlu0 %507
  %v510 = vmul.f32 %v501, %v508
  %512 = vrot.lane.b32.xlu0 %v510, 64
  %v513 = vpop.permute.xlu0 %512
  %v515 = vadd.f32 %v505, %v513
  %v516 = vtanh.pop %v515
  %518 = vrot.lane.b32.xlu0 %v516, 64
  %v519 = vpop.permute.xlu0 %518
  %v521 = vmul.f32 %v503, %v519
  %523 = vrot.lane.b32.xlu0 %v489, 64
  %v524 = vpop.permute.xlu0 %523
  %v526 = vsel %vm314, %v521, %v524
  %527 = vmatprep.subr.mxu0 %v54
  %528 = vmatpush1.msra.mxu0 %v53
  %529 = vmatprep.subr.mxu0 %v58
  %530 = vmatpush1.msra.mxu0 %v57
  %531 = vmatprep.subr.mxu0 %v62
  %532 = vmatpush1.msra.mxu0 %v61
  %533 = vmatprep.subr.mxu0 %v66
  %534 = vmatpush1.msra.mxu0 %v65
  %535 = vmatprep.subr.mxu0 %v70
  %536 = vmatpush1.msra.mxu0 %v69
  %537 = vmatprep.subr.mxu0 %v74
  %538 = vmatpush1.msra.mxu0 %v73
  %539 = vmatprep.subr.mxu0 %v78
  %540 = vmatpush1.msra.mxu0 %v77
  %541 = vmatprep.subr.mxu0 %v82
  %542 = vmatpush1.msra.mxu0 %v81
  %543 = vmatprep.subr.mxu0 %v86
  %544 = vmatpush1.msra.mxu0 %v85
  %545 = vmatprep.subr.mxu0 %v90
  %546 = vmatpush1.msra.mxu0 %v89
  %547 = vmatprep.subr.mxu0 %v94
  %548 = vmatpush1.msra.mxu0 %v93
  %549 = vmatprep.subr.mxu0 %v98
  %550 = vmatpush1.msra.mxu0 %v97
  %551 = vmatprep.subr.mxu0 %v102
  %552 = vmatpush1.msra.mxu0 %v101
  %553 = vmatprep.subr.mxu0 %v106
  %554 = vmatpush1.msra.mxu0 %v105
  %555 = vmatprep.subr.mxu0 %v110
  %556 = vmatpush1.msra.mxu0 %v109
  %557 = vmatprep.subr.mxu0 %v114
  %558 = vmatpush1.msra.mxu0 %v113
  %559 = vmatprep.subr.mxu0 0.0
  %560 = vmatpush1.msra.mxu0 0.0
  %561 = vmatprep.subr.mxu0 0.0
  %562 = vmatpush1.msra.mxu0 0.0
  %563 = vmatprep.subr.mxu0 0.0
  %564 = vmatpush1.msra.mxu0 0.0
  %565 = vmatprep.subr.mxu0 0.0
  %566 = vmatpush1.msra.mxu0 0.0
  %567 = vmatprep.subr.mxu0 0.0
  %568 = vmatpush1.msra.mxu0 0.0
  %569 = vmatprep.subr.mxu0 0.0
  %570 = vmatpush1.msra.mxu0 0.0
  %571 = vmatprep.subr.mxu0 0.0
  %572 = vmatpush1.msra.mxu0 0.0
  %573 = vmatprep.subr.mxu0 0.0
  %574 = vmatpush1.msra.mxu0 0.0
  %575 = vmatprep.subr.mxu0 0.0
  %576 = vmatpush1.msra.mxu0 0.0
  %577 = vmatprep.subr.mxu0 0.0
  %578 = vmatpush1.msra.mxu0 0.0
  %579 = vmatprep.subr.mxu0 0.0
  %580 = vmatpush1.msra.mxu0 0.0
  %581 = vmatprep.subr.mxu0 0.0
  %582 = vmatpush1.msra.mxu0 0.0
  %583 = vmatprep.subr.mxu0 0.0
  %584 = vmatpush1.msra.mxu0 0.0
  %585 = vmatprep.subr.mxu0 0.0
  %586 = vmatpush1.msra.mxu0 0.0
  %587 = vmatprep.subr.mxu0 0.0
  %588 = vmatpush1.msra.mxu0 0.0
  %589 = vmatprep.subr.mxu0 0.0
  %590 = vmatpush1.msra.mxu0 0.0
  %591 = vmatprep.mubr.f32.mxu0 0.0
  %592 = vmatmul.mubr.f32.gmra.mrb[0].mxu0 %v526
  %v593 = vpop.f32.mrb[0].mxu0
  %v594 = vadd.f32 0.0, %v593
  %v595 = vpop.f32.mrb[0].mxu0
  %v596 = vadd.f32 0.0, %v595
  %597 = vdwg.mxu0
  %598 = vmatprep.subr.mxu0 %v56
  %599 = vmatpush1.msra.mxu0 %v55
  %600 = vmatprep.subr.mxu0 %v60
  %601 = vmatpush1.msra.mxu0 %v59
  %602 = vmatprep.subr.mxu0 %v64
  %603 = vmatpush1.msra.mxu0 %v63
  %604 = vmatprep.subr.mxu0 %v68
  %605 = vmatpush1.msra.mxu0 %v67
  %606 = vmatprep.subr.mxu0 %v72
  %607 = vmatpush1.msra.mxu0 %v71
  %608 = vmatprep.subr.mxu0 %v76
  %609 = vmatpush1.msra.mxu0 %v75
  %610 = vmatprep.subr.mxu0 %v80
  %611 = vmatpush1.msra.mxu0 %v79
  %612 = vmatprep.subr.mxu0 %v84
  %613 = vmatpush1.msra.mxu0 %v83
  %614 = vmatprep.subr.mxu0 %v88
  %615 = vmatpush1.msra.mxu0 %v87
  %616 = vmatprep.subr.mxu0 %v92
  %617 = vmatpush1.msra.mxu0 %v91
  %618 = vmatprep.subr.mxu0 %v96
  %619 = vmatpush1.msra.mxu0 %v95
  %620 = vmatprep.subr.mxu0 %v100
  %621 = vmatpush1.msra.mxu0 %v99
  %622 = vmatprep.subr.mxu0 %v104
  %623 = vmatpush1.msra.mxu0 %v103
  %624 = vmatprep.subr.mxu0 %v108
  %625 = vmatpush1.msra.mxu0 %v107
  %626 = vmatprep.subr.mxu0 %v112
  %627 = vmatpush1.msra.mxu0 %v111
  %628 = vmatprep.subr.mxu0 %v116
  %629 = vmatpush1.msra.mxu0 %v115
  %630 = vmatprep.subr.mxu0 0.0
  %631 = vmatpush1.msra.mxu0 0.0
  %632 = vmatprep.subr.mxu0 0.0
  %633 = vmatpush1.msra.mxu0 0.0
  %634 = vmatprep.subr.mxu0 0.0
  %635 = vmatpush1.msra.mxu0 0.0
  %636 = vmatprep.subr.mxu0 0.0
  %637 = vmatpush1.msra.mxu0 0.0
  %638 = vmatprep.subr.mxu0 0.0
  %639 = vmatpush1.msra.mxu0 0.0
  %640 = vmatprep.subr.mxu0 0.0
  %641 = vmatpush1.msra.mxu0 0.0
  %642 = vmatprep.subr.mxu0 0.0
  %643 = vmatpush1.msra.mxu0 0.0
  %644 = vmatprep.subr.mxu0 0.0
  %645 = vmatpush1.msra.mxu0 0.0
  %646 = vmatprep.subr.mxu0 0.0
  %647 = vmatpush1.msra.mxu0 0.0
  %648 = vmatprep.subr.mxu0 0.0
  %649 = vmatpush1.msra.mxu0 0.0
  %650 = vmatprep.subr.mxu0 0.0
  %651 = vmatpush1.msra.mxu0 0.0
  %652 = vmatprep.subr.mxu0 0.0
  %653 = vmatpush1.msra.mxu0 0.0
  %654 = vmatprep.subr.mxu0 0.0
  %655 = vmatpush1.msra.mxu0 0.0
  %656 = vmatprep.subr.mxu0 0.0
  %657 = vmatpush1.msra.mxu0 0.0
  %658 = vmatprep.subr.mxu0 0.0
  %659 = vmatpush1.msra.mxu0 0.0
  %660 = vmatprep.subr.mxu0 0.0
  %661 = vmatpush1.msra.mxu0 0.0
  %662 = vmatprep.mubr.f32.mxu0 0.0
  %663 = vmatmul.mubr.f32.gmra.mrb[0].mxu0 %v526
  %v664 = vpop.f32.mrb[0].mxu0
  %v665 = vadd.f32 0.0, %v664
  %v666 = vpop.f32.mrb[0].mxu0
  %v667 = vadd.f32 0.0, %v666
  %668 = vdwg.mxu0
  %v669 = vadd.f32 %v594, %v33
  %v670 = vadd.f32 %v596, %v37
  %v671 = vxor.u32 %v669, 2147483648
  %v672 = vxor.u32 %v670, 2147483648
  %v673 = vmul.f32 %v671, 1.442695
  %v674 = vpow.pop %v673
  %v675 = vmul.f32 %v672, 1.442695
  %v676 = vpow.pop %v675
  %v677 = vadd.f32 %v674, 1.0
  %v678 = vadd.f32 %v676, 1.0
  %v679 = vrcp.pop %v677
  %v680 = vmul.f32 1.0, %v679
  %v681 = vrcp.pop %v678
  %v682 = vmul.f32 1.0, %v681
  %v683 = vtanh.pop %v670
  %v684 = vmul.f32 %v680, %v483
  %686 = vrot.lane.b32.xlu0 %v683, 64
  %v687 = vpop.permute.xlu0 %686
  %v689 = vmul.f32 %v680, %v687
  %691 = vrot.lane.b32.xlu0 %v689, 64
  %v692 = vpop.permute.xlu0 %691
  %v694 = vadd.f32 %v684, %v692
  %v695 = vtanh.pop %v694
  %697 = vrot.lane.b32.xlu0 %v695, 64
  %v698 = vpop.permute.xlu0 %697
  %v700 = vmul.f32 %v682, %v698
  %v701 = vadd.f32 %v248, %v665
  %v702 = vadd.f32 %v250, %v667
  %v703 = vxor.u32 %v701, 2147483648
  %v704 = vxor.u32 %v702, 2147483648
  %v705 = vmul.f32 %v703, 1.442695
  %v706 = vpow.pop %v705
  %v707 = vmul.f32 %v704, 1.442695
  %v708 = vpow.pop %v707
  %v709 = vadd.f32 %v706, 1.0
  %v710 = vadd.f32 %v708, 1.0
  %v711 = vrcp.pop %v709
  %v712 = vmul.f32 1.0, %v711
  %v713 = vrcp.pop %v710
  %v714 = vmul.f32 1.0, %v713
  %v715 = vtanh.pop %v702
  %v716 = vmul.f32 %v712, %v515
  %718 = vrot.lane.b32.xlu0 %v715, 64
  %v719 = vpop.permute.xlu0 %718
  %v721 = vmul.f32 %v712, %v719
  %723 = vrot.lane.b32.xlu0 %v721, 64
  %v724 = vpop.permute.xlu0 %723
  %v726 = vadd.f32 %v716, %v724
  %v727 = vtanh.pop %v726
  %729 = vrot.lane.b32.xlu0 %v727, 64
  %v730 = vpop.permute.xlu0 %729
  %v732 = vmul.f32 %v714, %v730
  %734 = vrot.lane.b32.xlu0 %v700, 64
  %v735 = vpop.permute.xlu0 %734
  %v737 = vsel %vm314, %v732, %v735
  %738 = vmatprep.subr.mxu0 %v54
  %739 = vmatpush1.msra.mxu0 %v53
  %740 = vmatprep.subr.mxu0 %v58
  %741 = vmatpush1.msra.mxu0 %v57
  %742 = vmatprep.subr.mxu0 %v62
  %743 = vmatpush1.msra.mxu0 %v61
  %744 = vmatprep.subr.mxu0 %v66
  %745 = vmatpush1.msra.mxu0 %v65
  %746 = vmatprep.subr.mxu0 %v70
  %747 = vmatpush1.msra.mxu0 %v69
  %748 = vmatprep.subr.mxu0 %v74
  %749 = vmatpush1.msra.mxu0 %v73
  %750 = vmatprep.subr.mxu0 %v78
  %751 = vmatpush1.msra.mxu0 %v77
  %752 = vmatprep.subr.mxu0 %v82
  %753 = vmatpush1.msra.mxu0 %v81
  %754 = vmatprep.subr.mxu0 %v86
  %755 = vmatpush1.msra.mxu0 %v85
  %756 = vmatprep.subr.mxu0 %v90
  %757 = vmatpush1.msra.mxu0 %v89
  %758 = vmatprep.subr.mxu0 %v94
  %759 = vmatpush1.msra.mxu0 %v93
  %760 = vmatprep.subr.mxu0 %v98
  %761 = vmatpush1.msra.mxu0 %v97
  %762 = vmatprep.subr.mxu0 %v102
  %763 = vmatpush1.msra.mxu0 %v101
  %764 = vmatprep.subr.mxu0 %v106
  %765 = vmatpush1.msra.mxu0 %v105
  %766 = vmatprep.subr.mxu0 %v110
  %767 = vmatpush1.msra.mxu0 %v109
  %768 = vmatprep.subr.mxu0 %v114
  %769 = vmatpush1.msra.mxu0 %v113
  %770 = vmatprep.subr.mxu0 0.0
  %771 = vmatpush1.msra.mxu0 0.0
  %772 = vmatprep.subr.mxu0 0.0
  %773 = vmatpush1.msra.mxu0 0.0
  %774 = vmatprep.subr.mxu0 0.0
  %775 = vmatpush1.msra.mxu0 0.0
  %776 = vmatprep.subr.mxu0 0.0
  %777 = vmatpush1.msra.mxu0 0.0
  %778 = vmatprep.subr.mxu0 0.0
  %779 = vmatpush1.msra.mxu0 0.0
  %780 = vmatprep.subr.mxu0 0.0
  %781 = vmatpush1.msra.mxu0 0.0
  %782 = vmatprep.subr.mxu0 0.0
  %783 = vmatpush1.msra.mxu0 0.0
  %784 = vmatprep.subr.mxu0 0.0
  %785 = vmatpush1.msra.mxu0 0.0
  %786 = vmatprep.subr.mxu0 0.0
  %787 = vmatpush1.msra.mxu0 0.0
  %788 = vmatprep.subr.mxu0 0.0
  %789 = vmatpush1.msra.mxu0 0.0
  %790 = vmatprep.subr.mxu0 0.0
  %791 = vmatpush1.msra.mxu0 0.0
  %792 = vmatprep.subr.mxu0 0.0
  %793 = vmatpush1.msra.mxu0 0.0
  %794 = vmatprep.subr.mxu0 0.0
  %795 = vmatpush1.msra.mxu0 0.0
  %796 = vmatprep.subr.mxu0 0.0
  %797 = vmatpush1.msra.mxu0 0.0
  %798 = vmatprep.subr.mxu0 0.0
  %799 = vmatpush1.msra.mxu0 0.0
  %800 = vmatprep.subr.mxu0 0.0
  %801 = vmatpush1.msra.mxu0 0.0
  %802 = vmatprep.mubr.f32.mxu0 0.0
  %803 = vmatmul.mubr.f32.gmra.mrb[0].mxu0 %v737
  %v804 = vpop.f32.mrb[0].mxu0
  %v805 = vadd.f32 0.0, %v804
  %v806 = vpop.f32.mrb[0].mxu0
  %v807 = vadd.f32 0.0, %v806
  %808 = vdwg.mxu0
  %809 = vmatprep.subr.mxu0 %v56
  %810 = vmatpush1.msra.mxu0 %v55
  %811 = vmatprep.subr.mxu0 %v60
  %812 = vmatpush1.msra.mxu0 %v59
  %813 = vmatprep.subr.mxu0 %v64
  %814 = vmatpush1.msra.mxu0 %v63
  %815 = vmatprep.subr.mxu0 %v68
  %816 = vmatpush1.msra.mxu0 %v67
  %817 = vmatprep.subr.mxu0 %v72
  %818 = vmatpush1.msra.mxu0 %v71
  %819 = vmatprep.subr.mxu0 %v76
  %820 = vmatpush1.msra.mxu0 %v75
  %821 = vmatprep.subr.mxu0 %v80
  %822 = vmatpush1.msra.mxu0 %v79
  %823 = vmatprep.subr.mxu0 %v84
  %824 = vmatpush1.msra.mxu0 %v83
  %825 = vmatprep.subr.mxu0 %v88
  %826 = vmatpush1.msra.mxu0 %v87
  %827 = vmatprep.subr.mxu0 %v92
  %828 = vmatpush1.msra.mxu0 %v91
  %829 = vmatprep.subr.mxu0 %v96
  %830 = vmatpush1.msra.mxu0 %v95
  %831 = vmatprep.subr.mxu0 %v100
  %832 = vmatpush1.msra.mxu0 %v99
  %833 = vmatprep.subr.mxu0 %v104
  %834 = vmatpush1.msra.mxu0 %v103
  %835 = vmatprep.subr.mxu0 %v108
  %836 = vmatpush1.msra.mxu0 %v107
  %837 = vmatprep.subr.mxu0 %v112
  %838 = vmatpush1.msra.mxu0 %v111
  %839 = vmatprep.subr.mxu0 %v116
  %840 = vmatpush1.msra.mxu0 %v115
  %841 = vmatprep.subr.mxu0 0.0
  %842 = vmatpush1.msra.mxu0 0.0
  %843 = vmatprep.subr.mxu0 0.0
  %844 = vmatpush1.msra.mxu0 0.0
  %845 = vmatprep.subr.mxu0 0.0
  %846 = vmatpush1.msra.mxu0 0.0
  %847 = vmatprep.subr.mxu0 0.0
  %848 = vmatpush1.msra.mxu0 0.0
  %849 = vmatprep.subr.mxu0 0.0
  %850 = vmatpush1.msra.mxu0 0.0
  %851 = vmatprep.subr.mxu0 0.0
  %852 = vmatpush1.msra.mxu0 0.0
  %853 = vmatprep.subr.mxu0 0.0
  %854 = vmatpush1.msra.mxu0 0.0
  %855 = vmatprep.subr.mxu0 0.0
  %856 = vmatpush1.msra.mxu0 0.0
  %857 = vmatprep.subr.mxu0 0.0
  %858 = vmatpush1.msra.mxu0 0.0
  %859 = vmatprep.subr.mxu0 0.0
  %860 = vmatpush1.msra.mxu0 0.0
  %861 = vmatprep.subr.mxu0 0.0
  %862 = vmatpush1.msra.mxu0 0.0
  %863 = vmatprep.subr.mxu0 0.0
  %864 = vmatpush1.msra.mxu0 0.0
  %865 = vmatprep.subr.mxu0 0.0
  %866 = vmatpush1.msra.mxu0 0.0
  %867 = vmatprep.subr.mxu0 0.0
  %868 = vmatpush1.msra.mxu0 0.0
  %869 = vmatprep.subr.mxu0 0.0
  %870 = vmatpush1.msra.mxu0 0.0
  %871 = vmatprep.subr.mxu0 0.0
  %872 = vmatpush1.msra.mxu0 0.0
  %873 = vmatprep.mubr.f32.mxu0 0.0
  %874 = vmatmul.mubr.f32.gmra.mrb[0].mxu0 %v737
  %v875 = vpop.f32.mrb[0].mxu0
  %v876 = vadd.f32 0.0, %v875
  %v877 = vpop.f32.mrb[0].mxu0
  %v878 = vadd.f32 0.0, %v877
  %879 = vdwg.mxu0
  %v880 = vadd.f32 %v805, %v33
  %v881 = vadd.f32 %v807, %v37
  %v882 = vxor.u32 %v880, 2147483648
  %v883 = vxor.u32 %v881, 2147483648
  %v884 = vmul.f32 %v882, 1.442695
  %v885 = vpow.pop %v884
  %v886 = vmul.f32 %v883, 1.442695
  %v887 = vpow.pop %v886
  %v888 = vadd.f32 %v885, 1.0
  %v889 = vadd.f32 %v887, 1.0
  %v890 = vrcp.pop %v888
  %v891 = vmul.f32 1.0, %v890
  %v892 = vrcp.pop %v889
  %v893 = vmul.f32 1.0, %v892
  %v894 = vtanh.pop %v881
  %v895 = vmul.f32 %v891, %v694
  %897 = vrot.lane.b32.xlu0 %v894, 64
  %v898 = vpop.permute.xlu0 %897
  %v900 = vmul.f32 %v891, %v898
  %902 = vrot.lane.b32.xlu0 %v900, 64
  %v903 = vpop.permute.xlu0 %902
  %v905 = vadd.f32 %v895, %v903
  %v906 = vtanh.pop %v905
  %908 = vrot.lane.b32.xlu0 %v906, 64
  %v909 = vpop.permute.xlu0 %908
  %v911 = vmul.f32 %v893, %v909
  %v912 = vadd.f32 %v254, %v876
  %v913 = vadd.f32 %v256, %v878
  %v914 = vxor.u32 %v912, 2147483648
  %v915 = vxor.u32 %v913, 2147483648
  %v916 = vmul.f32 %v914, 1.442695
  %v917 = vpow.pop %v916
  %v918 = vmul.f32 %v915, 1.442695
  %v919 = vpow.pop %v918
  %v920 = vadd.f32 %v917, 1.0
  %v921 = vadd.f32 %v919, 1.0
  %v922 = vrcp.pop %v920
  %v923 = vmul.f32 1.0, %v922
  %v924 = vrcp.pop %v921
  %v925 = vmul.f32 1.0, %v924
  %v926 = vtanh.pop %v913
  %v927 = vmul.f32 %v923, %v726
  %929 = vrot.lane.b32.xlu0 %v926, 64
  %v930 = vpop.permute.xlu0 %929
  %v932 = vmul.f32 %v923, %v930
  %934 = vrot.lane.b32.xlu0 %v932, 64
  %v935 = vpop.permute.xlu0 %934
  %v937 = vadd.f32 %v927, %v935
  %v938 = vtanh.pop %v937
  %940 = vrot.lane.b32.xlu0 %v938, 64
  %v941 = vpop.permute.xlu0 %940
  %v943 = vmul.f32 %v925, %v941
  %945 = vrot.lane.b32.xlu0 %v911, 64
  %v946 = vpop.permute.xlu0 %945
  %v948 = vsel %vm314, %v943, %v946
  %949 = vmatprep.subr.mxu0 %v54
  %950 = vmatpush1.msra.mxu0 %v53
  %951 = vmatprep.subr.mxu0 %v58
  %952 = vmatpush1.msra.mxu0 %v57
  %953 = vmatprep.subr.mxu0 %v62
  %954 = vmatpush1.msra.mxu0 %v61
  %955 = vmatprep.subr.mxu0 %v66
  %956 = vmatpush1.msra.mxu0 %v65
  %957 = vmatprep.subr.mxu0 %v70
  %958 = vmatpush1.msra.mxu0 %v69
  %959 = vmatprep.subr.mxu0 %v74
  %960 = vmatpush1.msra.mxu0 %v73
  %961 = vmatprep.subr.mxu0 %v78
  %962 = vmatpush1.msra.mxu0 %v77
  %963 = vmatprep.subr.mxu0 %v82
  %964 = vmatpush1.msra.mxu0 %v81
  %965 = vmatprep.subr.mxu0 %v86
  %966 = vmatpush1.msra.mxu0 %v85
  %967 = vmatprep.subr.mxu0 %v90
  %968 = vmatpush1.msra.mxu0 %v89
  %969 = vmatprep.subr.mxu0 %v94
  %970 = vmatpush1.msra.mxu0 %v93
  %971 = vmatprep.subr.mxu0 %v98
  %972 = vmatpush1.msra.mxu0 %v97
  %973 = vmatprep.subr.mxu0 %v102
  %974 = vmatpush1.msra.mxu0 %v101
  %975 = vmatprep.subr.mxu0 %v106
  %976 = vmatpush1.msra.mxu0 %v105
  %977 = vmatprep.subr.mxu0 %v110
  %978 = vmatpush1.msra.mxu0 %v109
  %979 = vmatprep.subr.mxu0 %v114
  %980 = vmatpush1.msra.mxu0 %v113
  %981 = vmatprep.subr.mxu0 0.0
  %982 = vmatpush1.msra.mxu0 0.0
  %983 = vmatprep.subr.mxu0 0.0
  %984 = vmatpush1.msra.mxu0 0.0
  %985 = vmatprep.subr.mxu0 0.0
  %986 = vmatpush1.msra.mxu0 0.0
  %987 = vmatprep.subr.mxu0 0.0
  %988 = vmatpush1.msra.mxu0 0.0
  %989 = vmatprep.subr.mxu0 0.0
  %990 = vmatpush1.msra.mxu0 0.0
  %991 = vmatprep.subr.mxu0 0.0
  %992 = vmatpush1.msra.mxu0 0.0
  %993 = vmatprep.subr.mxu0 0.0
  %994 = vmatpush1.msra.mxu0 0.0
  %995 = vmatprep.subr.mxu0 0.0
  %996 = vmatpush1.msra.mxu0 0.0
  %997 = vmatprep.subr.mxu0 0.0
  %998 = vmatpush1.msra.mxu0 0.0
  %999 = vmatprep.subr.mxu0 0.0
  %1000 = vmatpush1.msra.mxu0 0.0
  %1001 = vmatprep.subr.mxu0 0.0
  %1002 = vmatpush1.msra.mxu0 0.0
  %1003 = vmatprep.subr.mxu0 0.0
  %1004 = vmatpush1.msra.mxu0 0.0
  %1005 = vmatprep.subr.mxu0 0.0
  %1006 = vmatpush1.msra.mxu0 0.0
  %1007 = vmatprep.subr.mxu0 0.0
  %1008 = vmatpush1.msra.mxu0 0.0
  %1009 = vmatprep.subr.mxu0 0.0
  %1010 = vmatpush1.msra.mxu0 0.0
  %1011 = vmatprep.subr.mxu0 0.0
  %1012 = vmatpush1.msra.mxu0 0.0
  %1013 = vmatprep.mubr.f32.mxu0 0.0
  %1014 = vmatmul.mubr.f32.gmra.mrb[0].mxu0 %v948
  %v1015 = vpop.f32.mrb[0].mxu0
  %v1016 = vadd.f32 0.0, %v1015
  %v1017 = vpop.f32.mrb[0].mxu0
  %v1018 = vadd.f32 0.0, %v1017
  %1019 = vdwg.mxu0
  %1020 = vmatprep.subr.mxu0 %v56
  %1021 = vmatpush1.msra.mxu0 %v55
  %1022 = vmatprep.subr.mxu0 %v60
  %1023 = vmatpush1.msra.mxu0 %v59
  %1024 = vmatprep.subr.mxu0 %v64
  %1025 = vmatpush1.msra.mxu0 %v63
  %1026 = vmatprep.subr.mxu0 %v68
  %1027 = vmatpush1.msra.mxu0 %v67
  %1028 = vmatprep.subr.mxu0 %v72
  %1029 = vmatpush1.msra.mxu0 %v71
  %1030 = vmatprep.subr.mxu0 %v76
  %1031 = vmatpush1.msra.mxu0 %v75
  %1032 = vmatprep.subr.mxu0 %v80
  %1033 = vmatpush1.msra.mxu0 %v79
  %1034 = vmatprep.subr.mxu0 %v84
  %1035 = vmatpush1.msra.mxu0 %v83
  %1036 = vmatprep.subr.mxu0 %v88
  %1037 = vmatpush1.msra.mxu0 %v87
  %1038 = vmatprep.subr.mxu0 %v92
  %1039 = vmatpush1.msra.mxu0 %v91
  %1040 = vmatprep.subr.mxu0 %v96
  %1041 = vmatpush1.msra.mxu0 %v95
  %1042 = vmatprep.subr.mxu0 %v100
  %1043 = vmatpush1.msra.mxu0 %v99
  %1044 = vmatprep.subr.mxu0 %v104
  %1045 = vmatpush1.msra.mxu0 %v103
  %1046 = vmatprep.subr.mxu0 %v108
  %1047 = vmatpush1.msra.mxu0 %v107
  %1048 = vmatprep.subr.mxu0 %v112
  %1049 = vmatpush1.msra.mxu0 %v111
  %1050 = vmatprep.subr.mxu0 %v116
  %1051 = vmatpush1.msra.mxu0 %v115
  %1052 = vmatprep.subr.mxu0 0.0
  %1053 = vmatpush1.msra.mxu0 0.0
  %1054 = vmatprep.subr.mxu0 0.0
  %1055 = vmatpush1.msra.mxu0 0.0
  %1056 = vmatprep.subr.mxu0 0.0
  %1057 = vmatpush1.msra.mxu0 0.0
  %1058 = vmatprep.subr.mxu0 0.0
  %1059 = vmatpush1.msra.mxu0 0.0
  %1060 = vmatprep.subr.mxu0 0.0
  %1061 = vmatpush1.msra.mxu0 0.0
  %1062 = vmatprep.subr.mxu0 0.0
  %1063 = vmatpush1.msra.mxu0 0.0
  %1064 = vmatprep.subr.mxu0 0.0
  %1065 = vmatpush1.msra.mxu0 0.0
  %1066 = vmatprep.subr.mxu0 0.0
  %1067 = vmatpush1.msra.mxu0 0.0
  %1068 = vmatprep.subr.mxu0 0.0
  %1069 = vmatpush1.msra.mxu0 0.0
  %1070 = vmatprep.subr.mxu0 0.0
  %1071 = vmatpush1.msra.mxu0 0.0
  %1072 = vmatprep.subr.mxu0 0.0
  %1073 = vmatpush1.msra.mxu0 0.0
  %1074 = vmatprep.subr.mxu0 0.0
  %1075 = vmatpush1.msra.mxu0 0.0
  %1076 = vmatprep.subr.mxu0 0.0
  %1077 = vmatpush1.msra.mxu0 0.0
  %1078 = vmatprep.subr.mxu0 0.0
  %1079 = vmatpush1.msra.mxu0 0.0
  %1080 = vmatprep.subr.mxu0 0.0
  %1081 = vmatpush1.msra.mxu0 0.0
  %1082 = vmatprep.subr.mxu0 0.0
  %1083 = vmatpush1.msra.mxu0 0.0
  %1084 = vmatprep.mubr.f32.mxu0 0.0
  %1085 = vmatmul.mubr.f32.gmra.mrb[0].mxu0 %v948
  %v1086 = vpop.f32.mrb[0].mxu0
  %v1087 = vadd.f32 0.0, %v1086
  %v1088 = vpop.f32.mrb[0].mxu0
  %v1089 = vadd.f32 0.0, %v1088
  %1090 = vdwg.mxu0
  %v1091 = vadd.f32 %v1016, %v33
  %v1092 = vadd.f32 %v1018, %v37
  %v1093 = vxor.u32 %v1091, 2147483648
  %v1094 = vxor.u32 %v1092, 2147483648
  %v1095 = vmul.f32 %v1093, 1.442695
  %v1096 = vpow.pop %v1095
  %v1097 = vmul.f32 %v1094, 1.442695
  %v1098 = vpow.pop %v1097
  %v1099 = vadd.f32 %v1096, 1.0
  %v1100 = vadd.f32 %v1098, 1.0
  %v1101 = vrcp.pop %v1099
  %v1102 = vmul.f32 1.0, %v1101
  %v1103 = vrcp.pop %v1100
  %v1104 = vmul.f32 1.0, %v1103
  %v1105 = vtanh.pop %v1092
  %v1106 = vmul.f32 %v1102, %v905
  %1108 = vrot.lane.b32.xlu0 %v1105, 64
  %v1109 = vpop.permute.xlu0 %1108
  %v1111 = vmul.f32 %v1102, %v1109
  %1113 = vrot.lane.b32.xlu0 %v1111, 64
  %v1114 = vpop.permute.xlu0 %1113
  %v1116 = vadd.f32 %v1106, %v1114
  %v1117 = vtanh.pop %v1116
  %1119 = vrot.lane.b32.xlu0 %v1117, 64
  %v1120 = vpop.permute.xlu0 %1119
  %v1122 = vmul.f32 %v1104, %v1120
  %v1123 = vadd.f32 %v260, %v1087
  %v1124 = vadd.f32 %v262, %v1089
  %v1125 = vxor.u32 %v1123, 2147483648
  %v1126 = vxor.u32 %v1124, 2147483648
  %v1127 = vmul.f32 %v1125, 1.442695
  %v1128 = vpow.pop %v1127
  %v1129 = vmul.f32 %v1126, 1.442695
  %v1130 = vpow.pop %v1129
  %v1131 = vadd.f32 %v1128, 1.0
  %v1132 = vadd.f32 %v1130, 1.0
  %v1133 = vrcp.pop %v1131
  %v1134 = vmul.f32 1.0, %v1133
  %v1135 = vrcp.pop %v1132
  %v1136 = vmul.f32 1.0, %v1135
  %v1137 = vtanh.pop %v1124
  %v1138 = vmul.f32 %v1134, %v937
  %1140 = vrot.lane.b32.xlu0 %v1137, 64
  %v1141 = vpop.permute.xlu0 %1140
  %v1143 = vmul.f32 %v1134, %v1141
  %1145 = vrot.lane.b32.xlu0 %v1143, 64
  %v1146 = vpop.permute.xlu0 %1145
  %v1148 = vadd.f32 %v1138, %v1146
  %v1149 = vtanh.pop %v1148
  %1151 = vrot.lane.b32.xlu0 %v1149, 64
  %v1152 = vpop.permute.xlu0 %1151
  %v1154 = vmul.f32 %v1136, %v1152
  %1156 = vrot.lane.b32.xlu0 %v1122, 64
  %v1157 = vpop.permute.xlu0 %1156
  %v1159 = vsel %vm314, %v1154, %v1157
  %1160 = vmatprep.subr.mxu0 %v54
  %1161 = vmatpush1.msra.mxu0 %v53
  %1162 = vmatprep.subr.mxu0 %v58
  %1163 = vmatpush1.msra.mxu0 %v57
  %1164 = vmatprep.subr.mxu0 %v62
  %1165 = vmatpush1.msra.mxu0 %v61
  %1166 = vmatprep.subr.mxu0 %v66
  %1167 = vmatpush1.msra.mxu0 %v65
  %1168 = vmatprep.subr.mxu0 %v70
  %1169 = vmatpush1.msra.mxu0 %v69
  %1170 = vmatprep.subr.mxu0 %v74
  %1171 = vmatpush1.msra.mxu0 %v73
  %1172 = vmatprep.subr.mxu0 %v78
  %1173 = vmatpush1.msra.mxu0 %v77
  %1174 = vmatprep.subr.mxu0 %v82
  %1175 = vmatpush1.msra.mxu0 %v81
  %1176 = vmatprep.subr.mxu0 %v86
  %1177 = vmatpush1.msra.mxu0 %v85
  %1178 = vmatprep.subr.mxu0 %v90
  %1179 = vmatpush1.msra.mxu0 %v89
  %1180 = vmatprep.subr.mxu0 %v94
  %1181 = vmatpush1.msra.mxu0 %v93
  %1182 = vmatprep.subr.mxu0 %v98
  %1183 = vmatpush1.msra.mxu0 %v97
  %1184 = vmatprep.subr.mxu0 %v102
  %1185 = vmatpush1.msra.mxu0 %v101
  %1186 = vmatprep.subr.mxu0 %v106
  %1187 = vmatpush1.msra.mxu0 %v105
  %1188 = vmatprep.subr.mxu0 %v110
  %1189 = vmatpush1.msra.mxu0 %v109
  %1190 = vmatprep.subr.mxu0 %v114
  %1191 = vmatpush1.msra.mxu0 %v113
  %1192 = vmatprep.subr.mxu0 0.0
  %1193 = vmatpush1.msra.mxu0 0.0
  %1194 = vmatprep.subr.mxu0 0.0
  %1195 = vmatpush1.msra.mxu0 0.0
  %1196 = vmatprep.subr.mxu0 0.0
  %1197 = vmatpush1.msra.mxu0 0.0
  %1198 = vmatprep.subr.mxu0 0.0
  %1199 = vmatpush1.msra.mxu0 0.0
  %1200 = vmatprep.subr.mxu0 0.0
  %1201 = vmatpush1.msra.mxu0 0.0
  %1202 = vmatprep.subr.mxu0 0.0
  %1203 = vmatpush1.msra.mxu0 0.0
  %1204 = vmatprep.subr.mxu0 0.0
  %1205 = vmatpush1.msra.mxu0 0.0
  %1206 = vmatprep.subr.mxu0 0.0
  %1207 = vmatpush1.msra.mxu0 0.0
  %1208 = vmatprep.subr.mxu0 0.0
  %1209 = vmatpush1.msra.mxu0 0.0
  %1210 = vmatprep.subr.mxu0 0.0
  %1211 = vmatpush1.msra.mxu0 0.0
  %1212 = vmatprep.subr.mxu0 0.0
  %1213 = vmatpush1.msra.mxu0 0.0
  %1214 = vmatprep.subr.mxu0 0.0
  %1215 = vmatpush1.msra.mxu0 0.0
  %1216 = vmatprep.subr.mxu0 0.0
  %1217 = vmatpush1.msra.mxu0 0.0
  %1218 = vmatprep.subr.mxu0 0.0
  %1219 = vmatpush1.msra.mxu0 0.0
  %1220 = vmatprep.subr.mxu0 0.0
  %1221 = vmatpush1.msra.mxu0 0.0
  %1222 = vmatprep.subr.mxu0 0.0
  %1223 = vmatpush1.msra.mxu0 0.0
  %1224 = vmatprep.mubr.f32.mxu0 0.0
  %1225 = vmatmul.mubr.f32.gmra.mrb[0].mxu0 %v1159
  %v1226 = vpop.f32.mrb[0].mxu0
  %v1227 = vadd.f32 0.0, %v1226
  %v1228 = vpop.f32.mrb[0].mxu0
  %v1229 = vadd.f32 0.0, %v1228
  %1230 = vdwg.mxu0
  %1231 = vmatprep.subr.mxu0 %v56
  %1232 = vmatpush1.msra.mxu0 %v55
  %1233 = vmatprep.subr.mxu0 %v60
  %1234 = vmatpush1.msra.mxu0 %v59
  %1235 = vmatprep.subr.mxu0 %v64
  %1236 = vmatpush1.msra.mxu0 %v63
  %1237 = vmatprep.subr.mxu0 %v68
  %1238 = vmatpush1.msra.mxu0 %v67
  %1239 = vmatprep.subr.mxu0 %v72
  %1240 = vmatpush1.msra.mxu0 %v71
  %1241 = vmatprep.subr.mxu0 %v76
  %1242 = vmatpush1.msra.mxu0 %v75
  %1243 = vmatprep.subr.mxu0 %v80
  %1244 = vmatpush1.msra.mxu0 %v79
  %1245 = vmatprep.subr.mxu0 %v84
  %1246 = vmatpush1.msra.mxu0 %v83
  %1247 = vmatprep.subr.mxu0 %v88
  %1248 = vmatpush1.msra.mxu0 %v87
  %1249 = vmatprep.subr.mxu0 %v92
  %1250 = vmatpush1.msra.mxu0 %v91
  %1251 = vmatprep.subr.mxu0 %v96
  %1252 = vmatpush1.msra.mxu0 %v95
  %1253 = vmatprep.subr.mxu0 %v100
  %1254 = vmatpush1.msra.mxu0 %v99
  %1255 = vmatprep.subr.mxu0 %v104
  %1256 = vmatpush1.msra.mxu0 %v103
  %1257 = vmatprep.subr.mxu0 %v108
  %1258 = vmatpush1.msra.mxu0 %v107
  %1259 = vmatprep.subr.mxu0 %v112
  %1260 = vmatpush1.msra.mxu0 %v111
  %1261 = vmatprep.subr.mxu0 %v116
  %1262 = vmatpush1.msra.mxu0 %v115
  %1263 = vmatprep.subr.mxu0 0.0
  %1264 = vmatpush1.msra.mxu0 0.0
  %1265 = vmatprep.subr.mxu0 0.0
  %1266 = vmatpush1.msra.mxu0 0.0
  %1267 = vmatprep.subr.mxu0 0.0
  %1268 = vmatpush1.msra.mxu0 0.0
  %1269 = vmatprep.subr.mxu0 0.0
  %1270 = vmatpush1.msra.mxu0 0.0
  %1271 = vmatprep.subr.mxu0 0.0
  %1272 = vmatpush1.msra.mxu0 0.0
  %1273 = vmatprep.subr.mxu0 0.0
  %1274 = vmatpush1.msra.mxu0 0.0
  %1275 = vmatprep.subr.mxu0 0.0
  %1276 = vmatpush1.msra.mxu0 0.0
  %1277 = vmatprep.subr.mxu0 0.0
  %1278 = vmatpush1.msra.mxu0 0.0
  %1279 = vmatprep.subr.mxu0 0.0
  %1280 = vmatpush1.msra.mxu0 0.0
  %1281 = vmatprep.subr.mxu0 0.0
  %1282 = vmatpush1.msra.mxu0 0.0
  %1283 = vmatprep.subr.mxu0 0.0
  %1284 = vmatpush1.msra.mxu0 0.0
  %1285 = vmatprep.subr.mxu0 0.0
  %1286 = vmatpush1.msra.mxu0 0.0
  %1287 = vmatprep.subr.mxu0 0.0
  %1288 = vmatpush1.msra.mxu0 0.0
  %1289 = vmatprep.subr.mxu0 0.0
  %1290 = vmatpush1.msra.mxu0 0.0
  %1291 = vmatprep.subr.mxu0 0.0
  %1292 = vmatpush1.msra.mxu0 0.0
  %1293 = vmatprep.subr.mxu0 0.0
  %1294 = vmatpush1.msra.mxu0 0.0
  %1295 = vmatprep.mubr.f32.mxu0 0.0
  %1296 = vmatmul.mubr.f32.gmra.mrb[0].mxu0 %v1159
  %v1297 = vpop.f32.mrb[0].mxu0
  %v1298 = vadd.f32 0.0, %v1297
  %v1299 = vpop.f32.mrb[0].mxu0
  %v1300 = vadd.f32 0.0, %v1299
  %1301 = vdwg.mxu0
  %v1302 = vadd.f32 %v1227, %v33
  %v1303 = vadd.f32 %v1229, %v37
  %v1304 = vxor.u32 %v1302, 2147483648
  %v1305 = vxor.u32 %v1303, 2147483648
  %v1306 = vmul.f32 %v1304, 1.442695
  %v1307 = vpow.pop %v1306
  %v1308 = vmul.f32 %v1305, 1.442695
  %v1309 = vpow.pop %v1308
  %v1310 = vadd.f32 %v1307, 1.0
  %v1311 = vadd.f32 %v1309, 1.0
  %v1312 = vrcp.pop %v1310
  %v1313 = vmul.f32 1.0, %v1312
  %v1314 = vrcp.pop %v1311
  %v1315 = vmul.f32 1.0, %v1314
  %v1316 = vtanh.pop %v1303
  %v1317 = vmul.f32 %v1313, %v1116
  %1319 = vrot.lane.b32.xlu0 %v1316, 64
  %v1320 = vpop.permute.xlu0 %1319
  %v1322 = vmul.f32 %v1313, %v1320
  %1324 = vrot.lane.b32.xlu0 %v1322, 64
  %v1325 = vpop.permute.xlu0 %1324
  %v1327 = vadd.f32 %v1317, %v1325
  %v1328 = vtanh.pop %v1327
  %1330 = vrot.lane.b32.xlu0 %v1328, 64
  %v1331 = vpop.permute.xlu0 %1330
  %v1333 = vmul.f32 %v1315, %v1331
  %v1334 = vadd.f32 %v266, %v1298
  %v1335 = vadd.f32 %v268, %v1300
  %v1336 = vxor.u32 %v1334, 2147483648
  %v1337 = vxor.u32 %v1335, 2147483648
  %v1338 = vmul.f32 %v1336, 1.442695
  %v1339 = vpow.pop %v1338
  %v1340 = vmul.f32 %v1337, 1.442695
  %v1341 = vpow.pop %v1340
  %v1342 = vadd.f32 %v1339, 1.0
  %v1343 = vadd.f32 %v1341, 1.0
  %v1344 = vrcp.pop %v1342
  %v1345 = vmul.f32 1.0, %v1344
  %v1346 = vrcp.pop %v1343
  %v1347 = vmul.f32 1.0, %v1346
  %v1348 = vtanh.pop %v1335
  %v1349 = vmul.f32 %v1345, %v1148
  %1351 = vrot.lane.b32.xlu0 %v1348, 64
  %v1352 = vpop.permute.xlu0 %1351
  %v1354 = vmul.f32 %v1345, %v1352
  %1356 = vrot.lane.b32.xlu0 %v1354, 64
  %v1357 = vpop.permute.xlu0 %1356
  %v1359 = vadd.f32 %v1349, %v1357
  %v1360 = vtanh.pop %v1359
  %1362 = vrot.lane.b32.xlu0 %v1360, 64
  %v1363 = vpop.permute.xlu0 %1362
  %v1365 = vmul.f32 %v1347, %v1363
  %1367 = vrot.lane.b32.xlu0 %v1333, 64
  %v1368 = vpop.permute.xlu0 %1367
  %v1370 = vsel %vm314, %v1365, %v1368
  %1371 = vmatprep.subr.mxu0 %v54
  %1372 = vmatpush1.msra.mxu0 %v53
  %1373 = vmatprep.subr.mxu0 %v58
  %1374 = vmatpush1.msra.mxu0 %v57
  %1375 = vmatprep.subr.mxu0 %v62
  %1376 = vmatpush1.msra.mxu0 %v61
  %1377 = vmatprep.subr.mxu0 %v66
  %1378 = vmatpush1.msra.mxu0 %v65
  %1379 = vmatprep.subr.mxu0 %v70
  %1380 = vmatpush1.msra.mxu0 %v69
  %1381 = vmatprep.subr.mxu0 %v74
  %1382 = vmatpush1.msra.mxu0 %v73
  %1383 = vmatprep.subr.mxu0 %v78
  %1384 = vmatpush1.msra.mxu0 %v77
  %1385 = vmatprep.subr.mxu0 %v82
  %1386 = vmatpush1.msra.mxu0 %v81
  %1387 = vmatprep.subr.mxu0 %v86
  %1388 = vmatpush1.msra.mxu0 %v85
  %1389 = vmatprep.subr.mxu0 %v90
  %1390 = vmatpush1.msra.mxu0 %v89
  %1391 = vmatprep.subr.mxu0 %v94
  %1392 = vmatpush1.msra.mxu0 %v93
  %1393 = vmatprep.subr.mxu0 %v98
  %1394 = vmatpush1.msra.mxu0 %v97
  %1395 = vmatprep.subr.mxu0 %v102
  %1396 = vmatpush1.msra.mxu0 %v101
  %1397 = vmatprep.subr.mxu0 %v106
  %1398 = vmatpush1.msra.mxu0 %v105
  %1399 = vmatprep.subr.mxu0 %v110
  %1400 = vmatpush1.msra.mxu0 %v109
  %1401 = vmatprep.subr.mxu0 %v114
  %1402 = vmatpush1.msra.mxu0 %v113
  %1403 = vmatprep.subr.mxu0 0.0
  %1404 = vmatpush1.msra.mxu0 0.0
  %1405 = vmatprep.subr.mxu0 0.0
  %1406 = vmatpush1.msra.mxu0 0.0
  %1407 = vmatprep.subr.mxu0 0.0
  %1408 = vmatpush1.msra.mxu0 0.0
  %1409 = vmatprep.subr.mxu0 0.0
  %1410 = vmatpush1.msra.mxu0 0.0
  %1411 = vmatprep.subr.mxu0 0.0
  %1412 = vmatpush1.msra.mxu0 0.0
  %1413 = vmatprep.subr.mxu0 0.0
  %1414 = vmatpush1.msra.mxu0 0.0
  %1415 = vmatprep.subr.mxu0 0.0
  %1416 = vmatpush1.msra.mxu0 0.0
  %1417 = vmatprep.subr.mxu0 0.0
  %1418 = vmatpush1.msra.mxu0 0.0
  %1419 = vmatprep.subr.mxu0 0.0
  %1420 = vmatpush1.msra.mxu0 0.0
  %1421 = vmatprep.subr.mxu0 0.0
  %1422 = vmatpush1.msra.mxu0 0.0
  %1423 = vmatprep.subr.mxu0 0.0
  %1424 = vmatpush1.msra.mxu0 0.0
  %1425 = vmatprep.subr.mxu0 0.0
  %1426 = vmatpush1.msra.mxu0 0.0
  %1427 = vmatprep.subr.mxu0 0.0
  %1428 = vmatpush1.msra.mxu0 0.0
  %1429 = vmatprep.subr.mxu0 0.0
  %1430 = vmatpush1.msra.mxu0 0.0
  %1431 = vmatprep.subr.mxu0 0.0
  %1432 = vmatpush1.msra.mxu0 0.0
  %1433 = vmatprep.subr.mxu0 0.0
  %1434 = vmatpush1.msra.mxu0 0.0
  %1435 = vmatprep.mubr.f32.mxu0 0.0
  %1436 = vmatmul.mubr.f32.gmra.mrb[0].mxu0 %v1370
  %v1437 = vpop.f32.mrb[0].mxu0
  %v1438 = vadd.f32 0.0, %v1437
  %v1439 = vpop.f32.mrb[0].mxu0
  %v1440 = vadd.f32 0.0, %v1439
  %1441 = vdwg.mxu0
  %1442 = vmatprep.subr.mxu0 %v56
  %1443 = vmatpush1.msra.mxu0 %v55
  %1444 = vmatprep.subr.mxu0 %v60
  %1445 = vmatpush1.msra.mxu0 %v59
  %1446 = vmatprep.subr.mxu0 %v64
  %1447 = vmatpush1.msra.mxu0 %v63
  %1448 = vmatprep.subr.mxu0 %v68
  %1449 = vmatpush1.msra.mxu0 %v67
  %1450 = vmatprep.subr.mxu0 %v72
  %1451 = vmatpush1.msra.mxu0 %v71
  %1452 = vmatprep.subr.mxu0 %v76
  %1453 = vmatpush1.msra.mxu0 %v75
  %1454 = vmatprep.subr.mxu0 %v80
  %1455 = vmatpush1.msra.mxu0 %v79
  %1456 = vmatprep.subr.mxu0 %v84
  %1457 = vmatpush1.msra.mxu0 %v83
  %1458 = vmatprep.subr.mxu0 %v88
  %1459 = vmatpush1.msra.mxu0 %v87
  %1460 = vmatprep.subr.mxu0 %v92
  %1461 = vmatpush1.msra.mxu0 %v91
  %1462 = vmatprep.subr.mxu0 %v96
  %1463 = vmatpush1.msra.mxu0 %v95
  %1464 = vmatprep.subr.mxu0 %v100
  %1465 = vmatpush1.msra.mxu0 %v99
  %1466 = vmatprep.subr.mxu0 %v104
  %1467 = vmatpush1.msra.mxu0 %v103
  %1468 = vmatprep.subr.mxu0 %v108
  %1469 = vmatpush1.msra.mxu0 %v107
  %1470 = vmatprep.subr.mxu0 %v112
  %1471 = vmatpush1.msra.mxu0 %v111
  %1472 = vmatprep.subr.mxu0 %v116
  %1473 = vmatpush1.msra.mxu0 %v115
  %1474 = vmatprep.subr.mxu0 0.0
  %1475 = vmatpush1.msra.mxu0 0.0
  %1476 = vmatprep.subr.mxu0 0.0
  %1477 = vmatpush1.msra.mxu0 0.0
  %1478 = vmatprep.subr.mxu0 0.0
  %1479 = vmatpush1.msra.mxu0 0.0
  %1480 = vmatprep.subr.mxu0 0.0
  %1481 = vmatpush1.msra.mxu0 0.0
  %1482 = vmatprep.subr.mxu0 0.0
  %1483 = vmatpush1.msra.mxu0 0.0
  %1484 = vmatprep.subr.mxu0 0.0
  %1485 = vmatpush1.msra.mxu0 0.0
  %1486 = vmatprep.subr.mxu0 0.0
  %1487 = vmatpush1.msra.mxu0 0.0
  %1488 = vmatprep.subr.mxu0 0.0
  %1489 = vmatpush1.msra.mxu0 0.0
  %1490 = vmatprep.subr.mxu0 0.0
  %1491 = vmatpush1.msra.mxu0 0.0
  %1492 = vmatprep.subr.mxu0 0.0
  %1493 = vmatpush1.msra.mxu0 0.0
  %1494 = vmatprep.subr.mxu0 0.0
  %1495 = vmatpush1.msra.mxu0 0.0
  %1496 = vmatprep.subr.mxu0 0.0
  %1497 = vmatpush1.msra.mxu0 0.0
  %1498 = vmatprep.subr.mxu0 0.0
  %1499 = vmatpush1.msra.mxu0 0.0
  %1500 = vmatprep.subr.mxu0 0.0
  %1501 = vmatpush1.msra.mxu0 0.0
  %1502 = vmatprep.subr.mxu0 0.0
  %1503 = vmatpush1.msra.mxu0 0.0
  %1504 = vmatprep.subr.mxu0 0.0
  %1505 = vmatpush1.msra.mxu0 0.0
  %1506 = vmatprep.mubr.f32.mxu0 0.0
  %1507 = vmatmul.mubr.f32.gmra.mrb[0].mxu0 %v1370
  %v1508 = vpop.f32.mrb[0].mxu0
  %v1509 = vadd.f32 0.0, %v1508
  %v1510 = vpop.f32.mrb[0].mxu0
  %v1511 = vadd.f32 0.0, %v1510
  %1512 = vdwg.mxu0
  %v1513 = vadd.f32 %v1438, %v33
  %v1514 = vadd.f32 %v1440, %v37
  %v1515 = vxor.u32 %v1513, 2147483648
  %v1516 = vxor.u32 %v1514, 2147483648
  %v1517 = vmul.f32 %v1515, 1.442695
  %v1518 = vpow.pop %v1517
  %v1519 = vmul.f32 %v1516, 1.442695
  %v1520 = vpow.pop %v1519
  %v1521 = vadd.f32 %v1518, 1.0
  %v1522 = vadd.f32 %v1520, 1.0
  %v1523 = vrcp.pop %v1521
  %v1524 = vmul.f32 1.0, %v1523
  %v1525 = vrcp.pop %v1522
  %v1526 = vmul.f32 1.0, %v1525
  %v1527 = vtanh.pop %v1514
  %v1528 = vmul.f32 %v1524, %v1327
  %1530 = vrot.lane.b32.xlu0 %v1527, 64
  %v1531 = vpop.permute.xlu0 %1530
  %v1533 = vmul.f32 %v1524, %v1531
  %1535 = vrot.lane.b32.xlu0 %v1533, 64
  %v1536 = vpop.permute.xlu0 %1535
  %v1538 = vadd.f32 %v1528, %v1536
  %v1539 = vtanh.pop %v1538
  %1541 = vrot.lane.b32.xlu0 %v1539, 64
  %v1542 = vpop.permute.xlu0 %1541
  %v1544 = vmul.f32 %v1526, %v1542
  %v1545 = vadd.f32 %v272, %v1509
  %v1546 = vadd.f32 %v274, %v1511
  %v1547 = vxor.u32 %v1545, 2147483648
  %v1548 = vxor.u32 %v1546, 2147483648
  %v1549 = vmul.f32 %v1547, 1.442695
  %v1550 = vpow.pop %v1549
  %v1551 = vmul.f32 %v1548, 1.442695
  %v1552 = vpow.pop %v1551
  %v1553 = vadd.f32 %v1550, 1.0
  %v1554 = vadd.f32 %v1552, 1.0
  %v1555 = vrcp.pop %v1553
  %v1556 = vmul.f32 1.0, %v1555
  %v1557 = vrcp.pop %v1554
  %v1558 = vmul.f32 1.0, %v1557
  %v1559 = vtanh.pop %v1546
  %v1560 = vmul.f32 %v1556, %v1359
  %1562 = vrot.lane.b32.xlu0 %v1559, 64
  %v1563 = vpop.permute.xlu0 %1562
  %v1565 = vmul.f32 %v1556, %v1563
  %1567 = vrot.lane.b32.xlu0 %v1565, 64
  %v1568 = vpop.permute.xlu0 %1567
  %v1570 = vadd.f32 %v1560, %v1568
  %v1571 = vtanh.pop %v1570
  %1573 = vrot.lane.b32.xlu0 %v1571, 64
  %v1574 = vpop.permute.xlu0 %1573
  %v1576 = vmul.f32 %v1558, %v1574
  %1578 = vrot.lane.b32.xlu0 %v1544, 64
  %v1579 = vpop.permute.xlu0 %1578
  %v1581 = vsel %vm314, %v1576, %v1579
  %1582 = vmatprep.subr.mxu0 %v54
  %1583 = vmatpush1.msra.mxu0 %v53
  %1584 = vmatprep.subr.mxu0 %v58
  %1585 = vmatpush1.msra.mxu0 %v57
  %1586 = vmatprep.subr.mxu0 %v62
  %1587 = vmatpush1.msra.mxu0 %v61
  %1588 = vmatprep.subr.mxu0 %v66
  %1589 = vmatpush1.msra.mxu0 %v65
  %1590 = vmatprep.subr.mxu0 %v70
  %1591 = vmatpush1.msra.mxu0 %v69
  %1592 = vmatprep.subr.mxu0 %v74
  %1593 = vmatpush1.msra.mxu0 %v73
  %1594 = vmatprep.subr.mxu0 %v78
  %1595 = vmatpush1.msra.mxu0 %v77
  %1596 = vmatprep.subr.mxu0 %v82
  %1597 = vmatpush1.msra.mxu0 %v81
  %1598 = vmatprep.subr.mxu0 %v86
  %1599 = vmatpush1.msra.mxu0 %v85
  %1600 = vmatprep.subr.mxu0 %v90
  %1601 = vmatpush1.msra.mxu0 %v89
  %1602 = vmatprep.subr.mxu0 %v94
  %1603 = vmatpush1.msra.mxu0 %v93
  %1604 = vmatprep.subr.mxu0 %v98
  %1605 = vmatpush1.msra.mxu0 %v97
  %1606 = vmatprep.subr.mxu0 %v102
  %1607 = vmatpush1.msra.mxu0 %v101
  %1608 = vmatprep.subr.mxu0 %v106
  %1609 = vmatpush1.msra.mxu0 %v105
  %1610 = vmatprep.subr.mxu0 %v110
  %1611 = vmatpush1.msra.mxu0 %v109
  %1612 = vmatprep.subr.mxu0 %v114
  %1613 = vmatpush1.msra.mxu0 %v113
  %1614 = vmatprep.subr.mxu0 0.0
  %1615 = vmatpush1.msra.mxu0 0.0
  %1616 = vmatprep.subr.mxu0 0.0
  %1617 = vmatpush1.msra.mxu0 0.0
  %1618 = vmatprep.subr.mxu0 0.0
  %1619 = vmatpush1.msra.mxu0 0.0
  %1620 = vmatprep.subr.mxu0 0.0
  %1621 = vmatpush1.msra.mxu0 0.0
  %1622 = vmatprep.subr.mxu0 0.0
  %1623 = vmatpush1.msra.mxu0 0.0
  %1624 = vmatprep.subr.mxu0 0.0
  %1625 = vmatpush1.msra.mxu0 0.0
  %1626 = vmatprep.subr.mxu0 0.0
  %1627 = vmatpush1.msra.mxu0 0.0
  %1628 = vmatprep.subr.mxu0 0.0
  %1629 = vmatpush1.msra.mxu0 0.0
  %1630 = vmatprep.subr.mxu0 0.0
  %1631 = vmatpush1.msra.mxu0 0.0
  %1632 = vmatprep.subr.mxu0 0.0
  %1633 = vmatpush1.msra.mxu0 0.0
  %1634 = vmatprep.subr.mxu0 0.0
  %1635 = vmatpush1.msra.mxu0 0.0
  %1636 = vmatprep.subr.mxu0 0.0
  %1637 = vmatpush1.msra.mxu0 0.0
  %1638 = vmatprep.subr.mxu0 0.0
  %1639 = vmatpush1.msra.mxu0 0.0
  %1640 = vmatprep.subr.mxu0 0.0
  %1641 = vmatpush1.msra.mxu0 0.0
  %1642 = vmatprep.subr.mxu0 0.0
  %1643 = vmatpush1.msra.mxu0 0.0
  %1644 = vmatprep.subr.mxu0 0.0
  %1645 = vmatpush1.msra.mxu0 0.0
  %1646 = vmatprep.mubr.f32.mxu0 0.0
  %1647 = vmatmul.mubr.f32.gmra.mrb[0].mxu0 %v1581
  %v1648 = vpop.f32.mrb[0].mxu0
  %v1649 = vadd.f32 0.0, %v1648
  %v1650 = vpop.f32.mrb[0].mxu0
  %v1651 = vadd.f32 0.0, %v1650
  %1652 = vdwg.mxu0
  %1653 = vmatprep.subr.mxu0 %v56
  %1654 = vmatpush1.msra.mxu0 %v55
  %1655 = vmatprep.subr.mxu0 %v60
  %1656 = vmatpush1.msra.mxu0 %v59
  %1657 = vmatprep.subr.mxu0 %v64
  %1658 = vmatpush1.msra.mxu0 %v63
  %1659 = vmatprep.subr.mxu0 %v68
  %1660 = vmatpush1.msra.mxu0 %v67
  %1661 = vmatprep.subr.mxu0 %v72
  %1662 = vmatpush1.msra.mxu0 %v71
  %1663 = vmatprep.subr.mxu0 %v76
  %1664 = vmatpush1.msra.mxu0 %v75
  %1665 = vmatprep.subr.mxu0 %v80
  %1666 = vmatpush1.msra.mxu0 %v79
  %1667 = vmatprep.subr.mxu0 %v84
  %1668 = vmatpush1.msra.mxu0 %v83
  %1669 = vmatprep.subr.mxu0 %v88
  %1670 = vmatpush1.msra.mxu0 %v87
  %1671 = vmatprep.subr.mxu0 %v92
  %1672 = vmatpush1.msra.mxu0 %v91
  %1673 = vmatprep.subr.mxu0 %v96
  %1674 = vmatpush1.msra.mxu0 %v95
  %1675 = vmatprep.subr.mxu0 %v100
  %1676 = vmatpush1.msra.mxu0 %v99
  %1677 = vmatprep.subr.mxu0 %v104
  %1678 = vmatpush1.msra.mxu0 %v103
  %1679 = vmatprep.subr.mxu0 %v108
  %1680 = vmatpush1.msra.mxu0 %v107
  %1681 = vmatprep.subr.mxu0 %v112
  %1682 = vmatpush1.msra.mxu0 %v111
  %1683 = vmatprep.subr.mxu0 %v116
  %1684 = vmatpush1.msra.mxu0 %v115
  %1685 = vmatprep.subr.mxu0 0.0
  %1686 = vmatpush1.msra.mxu0 0.0
  %1687 = vmatprep.subr.mxu0 0.0
  %1688 = vmatpush1.msra.mxu0 0.0
  %1689 = vmatprep.subr.mxu0 0.0
  %1690 = vmatpush1.msra.mxu0 0.0
  %1691 = vmatprep.subr.mxu0 0.0
  %1692 = vmatpush1.msra.mxu0 0.0
  %1693 = vmatprep.subr.mxu0 0.0
  %1694 = vmatpush1.msra.mxu0 0.0
  %1695 = vmatprep.subr.mxu0 0.0
  %1696 = vmatpush1.msra.mxu0 0.0
  %1697 = vmatprep.subr.mxu0 0.0
  %1698 = vmatpush1.msra.mxu0 0.0
  %1699 = vmatprep.subr.mxu0 0.0
  %1700 = vmatpush1.msra.mxu0 0.0
  %1701 = vmatprep.subr.mxu0 0.0
  %1702 = vmatpush1.msra.mxu0 0.0
  %1703 = vmatprep.subr.mxu0 0.0
  %1704 = vmatpush1.msra.mxu0 0.0
  %1705 = vmatprep.subr.mxu0 0.0
  %1706 = vmatpush1.msra.mxu0 0.0
  %1707 = vmatprep.subr.mxu0 0.0
  %1708 = vmatpush1.msra.mxu0 0.0
  %1709 = vmatprep.subr.mxu0 0.0
  %1710 = vmatpush1.msra.mxu0 0.0
  %1711 = vmatprep.subr.mxu0 0.0
  %1712 = vmatpush1.msra.mxu0 0.0
  %1713 = vmatprep.subr.mxu0 0.0
  %1714 = vmatpush1.msra.mxu0 0.0
  %1715 = vmatprep.subr.mxu0 0.0
  %1716 = vmatpush1.msra.mxu0 0.0
  %1717 = vmatprep.mubr.f32.mxu0 0.0
  %1718 = vmatmul.mubr.f32.gmra.mrb[0].mxu0 %v1581
  %v1719 = vpop.f32.mrb[0].mxu0
  %v1720 = vadd.f32 0.0, %v1719
  %v1721 = vpop.f32.mrb[0].mxu0
  %v1722 = vadd.f32 0.0, %v1721
  %1723 = vdwg.mxu0
  %v1724 = vadd.f32 %v1649, %v33
  %v1725 = vadd.f32 %v1651, %v37
  %v1726 = vxor.u32 %v1724, 2147483648
  %v1727 = vxor.u32 %v1725, 2147483648
  %v1728 = vmul.f32 %v1726, 1.442695
  %v1729 = vpow.pop %v1728
  %v1730 = vmul.f32 %v1727, 1.442695
  %v1731 = vpow.pop %v1730
  %v1732 = vadd.f32 %v1729, 1.0
  %v1733 = vadd.f32 %v1731, 1.0
  %v1734 = vrcp.pop %v1732
  %v1735 = vmul.f32 1.0, %v1734
  %v1736 = vrcp.pop %v1733
  %v1737 = vmul.f32 1.0, %v1736
  %v1738 = vtanh.pop %v1725
  %v1739 = vmul.f32 %v1735, %v1538
  %1741 = vrot.lane.b32.xlu0 %v1738, 64
  %v1742 = vpop.permute.xlu0 %1741
  %v1744 = vmul.f32 %v1735, %v1742
  %1746 = vrot.lane.b32.xlu0 %v1744, 64
  %v1747 = vpop.permute.xlu0 %1746
  %v1749 = vadd.f32 %v1739, %v1747
  %v1750 = vtanh.pop %v1749
  %1752 = vrot.lane.b32.xlu0 %v1750, 64
  %v1753 = vpop.permute.xlu0 %1752
  %v1755 = vmul.f32 %v1737, %v1753
  %v1756 = vadd.f32 %v278, %v1720
  %v1757 = vadd.f32 %v280, %v1722
  %v1758 = vxor.u32 %v1756, 2147483648
  %v1759 = vxor.u32 %v1757, 2147483648
  %v1760 = vmul.f32 %v1758, 1.442695
  %v1761 = vpow.pop %v1760
  %v1762 = vmul.f32 %v1759, 1.442695
  %v1763 = vpow.pop %v1762
  %v1764 = vadd.f32 %v1761, 1.0
  %v1765 = vadd.f32 %v1763, 1.0
  %v1766 = vrcp.pop %v1764
  %v1767 = vmul.f32 1.0, %v1766
  %v1768 = vrcp.pop %v1765
  %v1769 = vmul.f32 1.0, %v1768
  %v1770 = vtanh.pop %v1757
  %v1771 = vmul.f32 %v1767, %v1570
  %1773 = vrot.lane.b32.xlu0 %v1770, 64
  %v1774 = vpop.permute.xlu0 %1773
  %v1776 = vmul.f32 %v1767, %v1774
  %1778 = vrot.lane.b32.xlu0 %v1776, 64
  %v1779 = vpop.permute.xlu0 %1778
  %v1781 = vadd.f32 %v1771, %v1779
  %v1782 = vtanh.pop %v1781
  %1784 = vrot.lane.b32.xlu0 %v1782, 64
  %v1785 = vpop.permute.xlu0 %1784
  %v1787 = vmul.f32 %v1769, %v1785
  %1789 = vrot.lane.b32.xlu0 %v1755, 64
  %v1790 = vpop.permute.xlu0 %1789
  %v1792 = vsel %vm314, %v1787, %v1790
  %1793 = vmatprep.subr.mxu0 %v54
  %1794 = vmatpush1.msra.mxu0 %v53
  %1795 = vmatprep.subr.mxu0 %v58
  %1796 = vmatpush1.msra.mxu0 %v57
  %1797 = vmatprep.subr.mxu0 %v62
  %1798 = vmatpush1.msra.mxu0 %v61
  %1799 = vmatprep.subr.mxu0 %v66
  %1800 = vmatpush1.msra.mxu0 %v65
  %1801 = vmatprep.subr.mxu0 %v70
  %1802 = vmatpush1.msra.mxu0 %v69
  %1803 = vmatprep.subr.mxu0 %v74
  %1804 = vmatpush1.msra.mxu0 %v73
  %1805 = vmatprep.subr.mxu0 %v78
  %1806 = vmatpush1.msra.mxu0 %v77
  %1807 = vmatprep.subr.mxu0 %v82
  %1808 = vmatpush1.msra.mxu0 %v81
  %1809 = vmatprep.subr.mxu0 %v86
  %1810 = vmatpush1.msra.mxu0 %v85
  %1811 = vmatprep.subr.mxu0 %v90
  %1812 = vmatpush1.msra.mxu0 %v89
  %1813 = vmatprep.subr.mxu0 %v94
  %1814 = vmatpush1.msra.mxu0 %v93
  %1815 = vmatprep.subr.mxu0 %v98
  %1816 = vmatpush1.msra.mxu0 %v97
  %1817 = vmatprep.subr.mxu0 %v102
  %1818 = vmatpush1.msra.mxu0 %v101
  %1819 = vmatprep.subr.mxu0 %v106
  %1820 = vmatpush1.msra.mxu0 %v105
  %1821 = vmatprep.subr.mxu0 %v110
  %1822 = vmatpush1.msra.mxu0 %v109
  %1823 = vmatprep.subr.mxu0 %v114
  %1824 = vmatpush1.msra.mxu0 %v113
  %1825 = vmatprep.subr.mxu0 0.0
  %1826 = vmatpush1.msra.mxu0 0.0
  %1827 = vmatprep.subr.mxu0 0.0
  %1828 = vmatpush1.msra.mxu0 0.0
  %1829 = vmatprep.subr.mxu0 0.0
  %1830 = vmatpush1.msra.mxu0 0.0
  %1831 = vmatprep.subr.mxu0 0.0
  %1832 = vmatpush1.msra.mxu0 0.0
  %1833 = vmatprep.subr.mxu0 0.0
  %1834 = vmatpush1.msra.mxu0 0.0
  %1835 = vmatprep.subr.mxu0 0.0
  %1836 = vmatpush1.msra.mxu0 0.0
  %1837 = vmatprep.subr.mxu0 0.0
  %1838 = vmatpush1.msra.mxu0 0.0
  %1839 = vmatprep.subr.mxu0 0.0
  %1840 = vmatpush1.msra.mxu0 0.0
  %1841 = vmatprep.subr.mxu0 0.0
  %1842 = vmatpush1.msra.mxu0 0.0
  %1843 = vmatprep.subr.mxu0 0.0
  %1844 = vmatpush1.msra.mxu0 0.0
  %1845 = vmatprep.subr.mxu0 0.0
  %1846 = vmatpush1.msra.mxu0 0.0
  %1847 = vmatprep.subr.mxu0 0.0
  %1848 = vmatpush1.msra.mxu0 0.0
  %1849 = vmatprep.subr.mxu0 0.0
  %1850 = vmatpush1.msra.mxu0 0.0
  %1851 = vmatprep.subr.mxu0 0.0
  %1852 = vmatpush1.msra.mxu0 0.0
  %1853 = vmatprep.subr.mxu0 0.0
  %1854 = vmatpush1.msra.mxu0 0.0
  %1855 = vmatprep.subr.mxu0 0.0
  %1856 = vmatpush1.msra.mxu0 0.0
  %1857 = vmatprep.mubr.f32.mxu0 0.0
  %1858 = vmatmul.mubr.f32.gmra.mrb[0].mxu0 %v1792
  %v1859 = vpop.f32.mrb[0].mxu0
  %v1860 = vadd.f32 0.0, %v1859
  %v1861 = vpop.f32.mrb[0].mxu0
  %v1862 = vadd.f32 0.0, %v1861
  %1863 = vdwg.mxu0
  %v1864 = vadd.f32 %v1860, %v33
  %v1865 = vadd.f32 %v1862, %v37
  %v1866 = vxor.u32 %v1864, 2147483648
  %v1867 = vxor.u32 %v1865, 2147483648
  %v1868 = vmul.f32 %v1866, 1.442695
  %v1869 = vpow.pop %v1868
  %v1870 = vmul.f32 %v1867, 1.442695
  %v1871 = vpow.pop %v1870
  %v1872 = vadd.f32 %v1869, 1.0
  %v1873 = vadd.f32 %v1871, 1.0
  %v1874 = vrcp.pop %v1872
  %v1875 = vmul.f32 1.0, %v1874
  %v1876 = vrcp.pop %v1873
  %v1877 = vmul.f32 1.0, %v1876
  %v1878 = vtanh.pop %v1865
  %v1879 = vmul.f32 %v1875, %v1749
  %1881 = vrot.lane.b32.xlu0 %v1878, 64
  %v1882 = vpop.permute.xlu0 %1881
  %v1884 = vmul.f32 %v1875, %v1882
  %1886 = vrot.lane.b32.xlu0 %v1884, 64
  %v1887 = vpop.permute.xlu0 %1886
  %v1889 = vadd.f32 %v1879, %v1887
  %v1890 = vtanh.pop %v1889
  %1892 = vrot.lane.b32.xlu0 %v1890, 64
  %v1893 = vpop.permute.xlu0 %1892
  %v1895 = vmul.f32 %v1877, %v1893
  %v1896 = vlaneseq
  %v1897 = vshrl.u32 %v1896, 7
  %v1898 = vsub.s32 0, %v1897
  %v1899 = vrot.slane %v40, %v1898
  %v1900 = vsel %vm314, %v489, 0
  %v1902 = vsel %vm314, %v700, 0
  %v1904 = vsel %vm314, %v911, 0
  %v1906 = vsel %vm314, %v1122, 0
  %v1908 = vsel %vm314, %v1333, 0
  %v1910 = vsel %vm314, %v1544, 0
  %v1912 = vsel %vm314, %v1755, 0
  %v1915 = vsel %vm314, %v1895, 0
  %1917 = vmatprep.subr.mxu0 0.0
  %1918 = vmatpush1.msra.mxu0 %v45
  %1919 = vmatprep.subr.mxu0 0.0
  %1920 = vmatpush1.msra.mxu0 %v46
  %1921 = vmatprep.subr.mxu0 0.0
  %1922 = vmatpush1.msra.mxu0 %v47
  %1923 = vmatprep.subr.mxu0 0.0
  %1924 = vmatpush1.msra.mxu0 %v48
  %1925 = vmatprep.subr.mxu0 0.0
  %1926 = vmatpush1.msra.mxu0 %v49
  %1927 = vmatprep.subr.mxu0 0.0
  %1928 = vmatpush1.msra.mxu0 %v50
  %1929 = vmatprep.subr.mxu0 0.0
  %1930 = vmatpush1.msra.mxu0 %v51
  %1931 = vmatprep.subr.mxu0 0.0
  %1932 = vmatpush1.msra.mxu0 %v52
  %1933 = vmatprep.subr.mxu0 0.0
  %1934 = vmatpush1.msra.mxu0 0.0
  %1935 = vmatprep.subr.mxu0 0.0
  %1936 = vmatpush1.msra.mxu0 0.0
  %1937 = vmatprep.subr.mxu0 0.0
  %1938 = vmatpush1.msra.mxu0 0.0
  %1939 = vmatprep.subr.mxu0 0.0
  %1940 = vmatpush1.msra.mxu0 0.0
  %1941 = vmatprep.subr.mxu0 0.0
  %1942 = vmatpush1.msra.mxu0 0.0
  %1943 = vmatprep.subr.mxu0 0.0
  %1944 = vmatpush1.msra.mxu0 0.0
  %1945 = vmatprep.subr.mxu0 0.0
  %1946 = vmatpush1.msra.mxu0 0.0
  %1947 = vmatprep.subr.mxu0 0.0
  %1948 = vmatpush1.msra.mxu0 0.0
  %1949 = vmatprep.subr.mxu0 0.0
  %1950 = vmatpush1.msra.mxu0 0.0
  %1951 = vmatprep.subr.mxu0 0.0
  %1952 = vmatpush1.msra.mxu0 0.0
  %1953 = vmatprep.subr.mxu0 0.0
  %1954 = vmatpush1.msra.mxu0 0.0
  %1955 = vmatprep.subr.mxu0 0.0
  %1956 = vmatpush1.msra.mxu0 0.0
  %1957 = vmatprep.subr.mxu0 0.0
  %1958 = vmatpush1.msra.mxu0 0.0
  %1959 = vmatprep.subr.mxu0 0.0
  %1960 = vmatpush1.msra.mxu0 0.0
  %1961 = vmatprep.subr.mxu0 0.0
  %1962 = vmatpush1.msra.mxu0 0.0
  %1963 = vmatprep.subr.mxu0 0.0
  %1964 = vmatpush1.msra.mxu0 0.0
  %1965 = vmatprep.subr.mxu0 0.0
  %1966 = vmatpush1.msra.mxu0 0.0
  %1967 = vmatprep.subr.mxu0 0.0
  %1968 = vmatpush1.msra.mxu0 0.0
  %1969 = vmatprep.subr.mxu0 0.0
  %1970 = vmatpush1.msra.mxu0 0.0
  %1971 = vmatprep.subr.mxu0 0.0
  %1972 = vmatpush1.msra.mxu0 0.0
  %1973 = vmatprep.subr.mxu0 0.0
  %1974 = vmatpush1.msra.mxu0 0.0
  %1975 = vmatprep.subr.mxu0 0.0
  %1976 = vmatpush1.msra.mxu0 0.0
  %1977 = vmatprep.subr.mxu0 0.0
  %1978 = vmatpush1.msra.mxu0 0.0
  %1979 = vmatprep.subr.mxu0 0.0
  %1980 = vmatpush1.msra.mxu0 0.0
  %1981 = vmatprep.mubr.f32.mxu0 0.0
  %1982 = vmatmul.mubr.f32.gmra.mrb[0].mxu0 %v1900
  %v1983 = vpop.f32.mrb[0].mxu0
  %v1984 = vadd.f32 %v1899, %v1983
  %v1985 = vpop.f32.mrb[0].mxu0
  %1986 = vmatprep.mubr.f32.mxu0 0.0
  %1987 = vmatmul.mubr.f32.gmra.mrb[0].mxu0 %v1902
  %v1988 = vpop.f32.mrb[0].mxu0
  %v1989 = vadd.f32 %v1899, %v1988
  %v1990 = vpop.f32.mrb[0].mxu0
  %1991 = vmatprep.mubr.f32.mxu0 0.0
  %1992 = vmatmul.mubr.f32.gmra.mrb[0].mxu0 %v1904
  %v1993 = vpop.f32.mrb[0].mxu0
  %v1994 = vadd.f32 %v1899, %v1993
  %v1995 = vpop.f32.mrb[0].mxu0
  %1996 = vmatprep.mubr.f32.mxu0 0.0
  %1997 = vmatmul.mubr.f32.gmra.mrb[0].mxu0 %v1906
  %v1998 = vpop.f32.mrb[0].mxu0
  %v1999 = vadd.f32 %v1899, %v1998
  %v2000 = vpop.f32.mrb[0].mxu0
  %2001 = vmatprep.mubr.f32.mxu0 0.0
  %2002 = vmatmul.mubr.f32.gmra.mrb[0].mxu0 %v1908
  %v2003 = vpop.f32.mrb[0].mxu0
  %v2004 = vadd.f32 %v1899, %v2003
  %v2005 = vpop.f32.mrb[0].mxu0
  %2006 = vmatprep.mubr.f32.mxu0 0.0
  %2007 = vmatmul.mubr.f32.gmra.mrb[0].mxu0 %v1910
  %v2008 = vpop.f32.mrb[0].mxu0
  %v2009 = vadd.f32 %v1899, %v2008
  %v2010 = vpop.f32.mrb[0].mxu0
  %2011 = vmatprep.mubr.f32.mxu0 0.0
  %2012 = vmatmul.mubr.f32.gmra.mrb[0].mxu0 %v1912
  %v2013 = vpop.f32.mrb[0].mxu0
  %v2014 = vadd.f32 %v1899, %v2013
  %v2015 = vpop.f32.mrb[0].mxu0
  %2016 = vmatprep.mubr.f32.mxu0 0.0
  %2017 = vmatmul.mubr.f32.gmra.mrb[0].mxu0 %v1915
  %v2018 = vpop.f32.mrb[0].mxu0
  %v2019 = vadd.f32 %v1899, %v2018
  %v2020 = vpop.f32.mrb[0].mxu0
  %2021 = vdwg.mxu0
  %v2022 = vtanh.pop %v1984
  %v2023 = vtanh.pop %v1989
  %v2024 = vtanh.pop %v1994
  %v2025 = vtanh.pop %v1999
  %v2026 = vtanh.pop %v2004
  %v2027 = vtanh.pop %v2009
  %v2028 = vtanh.pop %v2014
  %v2029 = vtanh.pop %v2019
  %v2030 = vlaneseq
  %v2031 = vshrl.u32 %v2030, 7
  %v2032 = vsub.s32 0, %v2031
  %v2033 = vrot.slane %v41, %v2032
  %v2034 = vmul.f32 %v2022, %v2033
  %v2035 = vmul.f32 %v2023, %v2033
  %v2036 = vmul.f32 %v2024, %v2033
  %v2037 = vmul.f32 %v2025, %v2033
  %v2038 = vmul.f32 %v2026, %v2033
  %v2039 = vmul.f32 %v2027, %v2033
  %v2040 = vmul.f32 %v2028, %v2033
  %v2041 = vmul.f32 %v2029, %v2033
  %v2042 = vsel %vm314, %v2034, 0.0
  %2043 = vadd.xlane.f32.xlu0 %v2042
  %v2044 = vpop.xlane.xlu0 %2043
  %v2045 = vsel %vm314, %v2035, 0.0
  %2046 = vadd.xlane.f32.xlu0 %v2045
  %v2047 = vpop.xlane.xlu0 %2046
  %v2048 = vsel %vm314, %v2036, 0.0
  %2049 = vadd.xlane.f32.xlu0 %v2048
  %v2050 = vpop.xlane.xlu0 %2049
  %v2051 = vsel %vm314, %v2037, 0.0
  %2052 = vadd.xlane.f32.xlu0 %v2051
  %v2053 = vpop.xlane.xlu0 %2052
  %v2054 = vsel %vm314, %v2038, 0.0
  %2055 = vadd.xlane.f32.xlu0 %v2054
  %v2056 = vpop.xlane.xlu0 %2055
  %v2057 = vsel %vm314, %v2039, 0.0
  %2058 = vadd.xlane.f32.xlu0 %v2057
  %v2059 = vpop.xlane.xlu0 %2058
  %v2060 = vsel %vm314, %v2040, 0.0
  %2061 = vadd.xlane.f32.xlu0 %v2060
  %v2062 = vpop.xlane.xlu0 %2061
  %v2063 = vsel %vm314, %v2041, 0.0
  %2064 = vadd.xlane.f32.xlu0 %v2063
  %v2065 = vpop.xlane.xlu0 %2064
  %v2066 = vlaneseq
  %v2067 = vshrl.u32 %v2066, 7
  %v2068 = vld [vmem:[%s1] sm:$0x1]
  %v2069 = vlaneseq
  %v2070 = vshrl.u32 %v2069, 7
  %v2071 = vsub.s32 0, %v2070
  %v2072 = vrot.slane %v2068, %v2071
  %vm2073 = vcmp.lt.s32.totalorder %v2067, %v2072
  %v2082 = vlaneseq
  %v2083 = vand.u32 %v2082, 127
  %v2084 = vlaneseq
  %v2085 = vshrl.u32 %v2084, 7
  %v2086 = vsub.s32 %v2083, %v2085
  %v2087 = vrot.slane %v2044, %v2086
  %v2088 = vlaneseq
  %v2089 = vshrl.u32 %v2088, 7
  %v2090 = vsub.s32 %v2083, %v2089
  %v2091 = vrot.slane %v2047, %v2090
  %v2092 = vlaneseq
  %v2093 = vshrl.u32 %v2092, 7
  %v2094 = vsub.s32 %v2083, %v2093
  %v2095 = vrot.slane %v2050, %v2094
  %v2096 = vlaneseq
  %v2097 = vshrl.u32 %v2096, 7
  %v2098 = vsub.s32 %v2083, %v2097
  %v2099 = vrot.slane %v2053, %v2098
  %v2100 = vlaneseq
  %v2101 = vshrl.u32 %v2100, 7
  %v2102 = vsub.s32 %v2083, %v2101
  %v2103 = vrot.slane %v2056, %v2102
  %v2104 = vlaneseq
  %v2105 = vshrl.u32 %v2104, 7
  %v2106 = vsub.s32 %v2083, %v2105
  %v2107 = vrot.slane %v2059, %v2106
  %v2108 = vlaneseq
  %v2109 = vshrl.u32 %v2108, 7
  %v2110 = vsub.s32 %v2083, %v2109
  %v2111 = vrot.slane %v2062, %v2110
  %v2112 = vlaneseq
  %v2113 = vshrl.u32 %v2112, 7
  %v2114 = vsub.s32 %v2083, %v2113
  %v2115 = vrot.slane %v2065, %v2114
  %vm2116 = vcmask 1041409
  %v2117 = vsel %vm2116, %v2091, %v2087
  %vm2118 = vcmask 1042434
  %v2119 = vsel %vm2118, %v2095, %v2117
  %vm2120 = vcmask 1043459
  %v2121 = vsel %vm2120, %v2099, %v2119
  %vm2122 = vcmask 1044484
  %v2123 = vsel %vm2122, %v2103, %v2121
  %vm2124 = vcmask 1045509
  %v2125 = vsel %vm2124, %v2107, %v2123
  %vm2126 = vcmask 1046534
  %v2127 = vsel %vm2126, %v2111, %v2125
  %vm2128 = vcmask 1047559
  %v2129 = vsel %vm2128, %v2115, %v2127
  %v2131 = vsel %vm2073, %v2129, -1e+09
  %vm2132 = vcmask 64512
  %v2133 = vsel %vm2132, %v2131, -inf
  %v2134 = vrot.slane %v2133, 4
  %v2135 = vmax.f32 %v2133, %v2134
  %v2136 = vrot.slane %v2135, 2
  %v2137 = vmax.f32 %v2135, %v2136
  %v2138 = vrot.slane %v2137, 1
  %v2139 = vmax.f32 %v2137, %v2138
  %v2140 = vsub.f32 %v2131, %v2139
  %v2141 = vmul.f32 %v2140, 1.442695
  %v2142 = vpow.pop %v2141
  %v2143 = vsel %vm2132, %v2142, 0.0
  %v2144 = vrot.slane %v2143, 4
  %v2145 = vadd.f32 %v2143, %v2144
  %v2146 = vrot.slane %v2145, 2
  %v2147 = vadd.f32 %v2145, %v2146
  %v2148 = vrot.slane %v2147, 1
  %v2149 = vadd.f32 %v2147, %v2148
  %v2150 = vrcp.pop %v2149
  %v2151 = vmul.f32 %v2142, %v2150
  %v2152 = vlaneseq
  %v2153 = vshrl.u32 %v2152, 7
  %v2154 = vsub.s32 0, %v2153
  %v2155 = vrot.slane %v2151, %v2154
  %2157 = vbcast.lane.b32.xlu0 %v2155, 256
  %v2158 = vpop.permute.xlu0 %2157
  %v2159 = vlaneseq
  %v2160 = vshrl.u32 %v2159, 7
  %v2161 = vsub.s32 1, %v2160
  %v2162 = vrot.slane %v2151, %v2161
  %2164 = vbcast.lane.b32.xlu0 %v2162, 256
  %v2165 = vpop.permute.xlu0 %2164
  %v2166 = vlaneseq
  %v2167 = vshrl.u32 %v2166, 7
  %v2168 = vsub.s32 2, %v2167
  %v2169 = vrot.slane %v2151, %v2168
  %2171 = vbcast.lane.b32.xlu0 %v2169, 256
  %v2172 = vpop.permute.xlu0 %2171
  %v2173 = vlaneseq
  %v2174 = vshrl.u32 %v2173, 7
  %v2175 = vsub.s32 3, %v2174
  %v2176 = vrot.slane %v2151, %v2175
  %2178 = vbcast.lane.b32.xlu0 %v2176, 256
  %v2179 = vpop.permute.xlu0 %2178
  %v2180 = vlaneseq
  %v2181 = vshrl.u32 %v2180, 7
  %v2182 = vsub.s32 4, %v2181
  %v2183 = vrot.slane %v2151, %v2182
  %2185 = vbcast.lane.b32.xlu0 %v2183, 256
  %v2186 = vpop.permute.xlu0 %2185
  %v2187 = vlaneseq
  %v2188 = vshrl.u32 %v2187, 7
  %v2189 = vsub.s32 5, %v2188
  %v2190 = vrot.slane %v2151, %v2189
  %2192 = vbcast.lane.b32.xlu0 %v2190, 256
  %v2193 = vpop.permute.xlu0 %2192
  %v2194 = vlaneseq
  %v2195 = vshrl.u32 %v2194, 7
  %v2196 = vsub.s32 6, %v2195
  %v2197 = vrot.slane %v2151, %v2196
  %2199 = vbcast.lane.b32.xlu0 %v2197, 256
  %v2200 = vpop.permute.xlu0 %2199
  %v2201 = vlaneseq
  %v2202 = vshrl.u32 %v2201, 7
  %v2203 = vsub.s32 7, %v2202
  %v2204 = vrot.slane %v2151, %v2203
  %2206 = vbcast.lane.b32.xlu0 %v2204, 256
  %v2207 = vpop.permute.xlu0 %2206
  %v2208 = vmul.f32 %v2158, %v489
  %v2209 = vmul.f32 %v2165, %v700
  %v2210 = vmul.f32 %v2172, %v911
  %v2211 = vmul.f32 %v2179, %v1122
  %v2212 = vmul.f32 %v2186, %v1333
  %v2213 = vmul.f32 %v2193, %v1544
  %v2214 = vmul.f32 %v2200, %v1755
  %v2215 = vmul.f32 %v2207, %v1895
  %v2216 = vsel %vm314, %v2208, 0.0
  %v2217 = vsel %vm314, %v2209, 0.0
  %v2218 = vadd.f32 %v2216, %v2217
  %v2219 = vsel %vm314, %v2210, 0.0
  %v2220 = vadd.f32 %v2218, %v2219
  %v2221 = vsel %vm314, %v2211, 0.0
  %v2222 = vadd.f32 %v2220, %v2221
  %v2223 = vsel %vm314, %v2212, 0.0
  %v2224 = vadd.f32 %v2222, %v2223
  %v2225 = vsel %vm314, %v2213, 0.0
  %v2226 = vadd.f32 %v2224, %v2225
  %v2227 = vsel %vm314, %v2214, 0.0
  %v2228 = vadd.f32 %v2226, %v2227
  %v2229 = vsel %vm314, %v2215, 0.0
  %v2230 = vadd.f32 %v2228, %v2229
  %v2231 = vsel %vm314, %v2230, 0.0
  %2232 = vadd.xlane.f32.xlu0 %v2231
  %v2233 = vpop.xlane.xlu0 %2232
  %v2234 = vrcp.pop 64.0
  %v2235 = vmul.f32 %v2233, %v2234
  %v2236 = vsub.f32 %v2230, %v2235
  %v2237 = vmul.f32 %v2236, %v2236
  %v2238 = vsel %vm314, %v2237, 0.0
  %2239 = vadd.xlane.f32.xlu0 %v2238
  %v2240 = vpop.xlane.xlu0 %2239
  %v2241 = vmul.f32 %v2240, %v2234
  %v2242 = vadd.f32 %v2241, 1e-05
  %v2243 = vrsqrt.pop %v2242
  %v2244 = vmul.f32 %v2236, %v2243
  %v2245 = vlaneseq
  %v2246 = vshrl.u32 %v2245, 7
  %v2247 = vsub.s32 0, %v2246
  %v2248 = vrot.slane %v42, %v2247
  %v2249 = vmul.f32 %v2244, %v2248
  %v2250 = vlaneseq
  %v2251 = vshrl.u32 %v2250, 7
  %v2252 = vsub.s32 0, %v2251
  %v2253 = vrot.slane %v43, %v2252
  %v2254 = vadd.f32 %v2249, %v2253
  %v2255 = vlaneseq
  %v2256 = vshrl.u32 %v2255, 7
  %v2257 = vsub.s32 0, %v2256
  %v2258 = vrot.slane %v44, %v2257
  %2267 = vrot.lane.b32.xlu0 %v45, 64
  %v2268 = vpop.permute.xlu0 %2267
  %2269 = vrot.lane.b32.xlu0 %v46, 64
  %v2270 = vpop.permute.xlu0 %2269
  %2271 = vrot.lane.b32.xlu0 %v47, 64
  %v2272 = vpop.permute.xlu0 %2271
  %2273 = vrot.lane.b32.xlu0 %v48, 64
  %v2274 = vpop.permute.xlu0 %2273
  %2275 = vrot.lane.b32.xlu0 %v49, 64
  %v2276 = vpop.permute.xlu0 %2275
  %2277 = vrot.lane.b32.xlu0 %v50, 64
  %v2278 = vpop.permute.xlu0 %2277
  %2279 = vrot.lane.b32.xlu0 %v51, 64
  %v2280 = vpop.permute.xlu0 %2279
  %2281 = vrot.lane.b32.xlu0 %v52, 64
  %v2282 = vpop.permute.xlu0 %2281
  %v2292 = vsel %vm314, %v2254, 0
  %2294 = vmatprep.subr.mxu0 0.0
  %2295 = vmatpush1.msra.mxu0 %v2268
  %2296 = vmatprep.subr.mxu0 0.0
  %2297 = vmatpush1.msra.mxu0 %v2270
  %2298 = vmatprep.subr.mxu0 0.0
  %2299 = vmatpush1.msra.mxu0 %v2272
  %2300 = vmatprep.subr.mxu0 0.0
  %2301 = vmatpush1.msra.mxu0 %v2274
  %2302 = vmatprep.subr.mxu0 0.0
  %2303 = vmatpush1.msra.mxu0 %v2276
  %2304 = vmatprep.subr.mxu0 0.0
  %2305 = vmatpush1.msra.mxu0 %v2278
  %2306 = vmatprep.subr.mxu0 0.0
  %2307 = vmatpush1.msra.mxu0 %v2280
  %2308 = vmatprep.subr.mxu0 0.0
  %2309 = vmatpush1.msra.mxu0 %v2282
  %2310 = vmatprep.subr.mxu0 0.0
  %2311 = vmatpush1.msra.mxu0 0.0
  %2312 = vmatprep.subr.mxu0 0.0
  %2313 = vmatpush1.msra.mxu0 0.0
  %2314 = vmatprep.subr.mxu0 0.0
  %2315 = vmatpush1.msra.mxu0 0.0
  %2316 = vmatprep.subr.mxu0 0.0
  %2317 = vmatpush1.msra.mxu0 0.0
  %2318 = vmatprep.subr.mxu0 0.0
  %2319 = vmatpush1.msra.mxu0 0.0
  %2320 = vmatprep.subr.mxu0 0.0
  %2321 = vmatpush1.msra.mxu0 0.0
  %2322 = vmatprep.subr.mxu0 0.0
  %2323 = vmatpush1.msra.mxu0 0.0
  %2324 = vmatprep.subr.mxu0 0.0
  %2325 = vmatpush1.msra.mxu0 0.0
  %2326 = vmatprep.subr.mxu0 0.0
  %2327 = vmatpush1.msra.mxu0 0.0
  %2328 = vmatprep.subr.mxu0 0.0
  %2329 = vmatpush1.msra.mxu0 0.0
  %2330 = vmatprep.subr.mxu0 0.0
  %2331 = vmatpush1.msra.mxu0 0.0
  %2332 = vmatprep.subr.mxu0 0.0
  %2333 = vmatpush1.msra.mxu0 0.0
  %2334 = vmatprep.subr.mxu0 0.0
  %2335 = vmatpush1.msra.mxu0 0.0
  %2336 = vmatprep.subr.mxu0 0.0
  %2337 = vmatpush1.msra.mxu0 0.0
  %2338 = vmatprep.subr.mxu0 0.0
  %2339 = vmatpush1.msra.mxu0 0.0
  %2340 = vmatprep.subr.mxu0 0.0
  %2341 = vmatpush1.msra.mxu0 0.0
  %2342 = vmatprep.subr.mxu0 0.0
  %2343 = vmatpush1.msra.mxu0 0.0
  %2344 = vmatprep.subr.mxu0 0.0
  %2345 = vmatpush1.msra.mxu0 0.0
  %2346 = vmatprep.subr.mxu0 0.0
  %2347 = vmatpush1.msra.mxu0 0.0
  %2348 = vmatprep.subr.mxu0 0.0
  %2349 = vmatpush1.msra.mxu0 0.0
  %2350 = vmatprep.subr.mxu0 0.0
  %2351 = vmatpush1.msra.mxu0 0.0
  %2352 = vmatprep.subr.mxu0 0.0
  %2353 = vmatpush1.msra.mxu0 0.0
  %2354 = vmatprep.subr.mxu0 0.0
  %2355 = vmatpush1.msra.mxu0 0.0
  %2356 = vmatprep.subr.mxu0 0.0
  %2357 = vmatpush1.msra.mxu0 0.0
  %2358 = vmatprep.mubr.f32.mxu0 0.0
  %2359 = vmatmul.mubr.f32.gmra.mrb[0].mxu0 %v2292
  %v2360 = vpop.f32.mrb[0].mxu0
  %v2361 = vadd.f32 %v2258, %v2360
  %v2362 = vpop.f32.mrb[0].mxu0
  %2363 = vdwg.mxu0
  %vm2364 = vcmask 23552
  %2365 = vst.msk [vmem:[%s7] sm:$0xff] %vm2364, %v2361
  // Predicated region
  $region30: #{hockey_forward.1} parent=0 // pred_check
    _
  $region31: #{hockey_forward.1} parent=0 // pred_check_branch
    %2367 = sbr.rel (0) target = $region33
  $region32: #{hockey_forward.1} parent=0 // pred_region
    _
  $region33: #{hockey_forward.1} parent=0 // pred_fallthru
    _
  // Predicated region
  $region34: #{hockey_forward.1} parent=0 // pred_check
    _
  $region35: #{hockey_forward.1} parent=0 // pred_check_branch
    %2369 = sbr.rel (0) target = $region37
  $region36: #{hockey_forward.1} parent=0 // pred_region
    _
  $region37: #{hockey_forward.1} parent=0 // pred_fallthru
    _

</llo_original>
